<compile_context>
chip_gen: v6e
topology: v6e:2x2x1
jax: 0.10.0
libtpu: 0.0.40
codegen_flags: <defaults>
</compile_context>

<pallas_src>
import functools

import numpy as np
import jax
import jax.numpy as jnp
from jax import lax
from jax.experimental import pallas as pl
from jax.experimental.pallas import tpu as pltpu


# ---------------------------------------------------------------------------
# Host-side constant builders (computed once, outside the kernel).
# ---------------------------------------------------------------------------
def _folded_tap_weights(w_l, w_out, upsample_w):
    """w_l: (3, 3, Cin, Cout) conv weights -> (3, Win*Cin, w_out*Cout).

    Per-ky GEMM weights with the kx taps, the 1-px zero width-padding and
    (optionally) the 2x nearest width-upsample folded in, so that
        out[:, wo*Cout+co] = sum_ky row_shift(inp, ky-1) @ T[ky]
    reproduces a 3x3 conv (padding=1) along the flattened (w, c) lane axis."""
    _, _, cin, cout = w_l.shape
    w_in = w_out // 2 if upsample_w else w_out
    t = np.zeros((3, w_in * cin, w_out * cout), np.float32)
    w_np = np.asarray(w_l, np.float32)
    for ky in range(3):
        for wo in range(w_out):
            for kx in range(3):
                wi = wo + kx - 1
                if not 0 <= wi < w_out:
                    continue                      # zero-padding column
                ws = wi // 2 if upsample_w else wi
                t[ky, ws * cin:(ws + 1) * cin, wo * cout:(wo + 1) * cout] += w_np[ky, kx]
    return t


def _row_shift_matrices(h2, bm):
    """(3, bm*h2, bm*h2): RK[ky] @ X selects, for output row (b, ho), the input
    row (b, ho+ky-1) with zeros outside [0, h2) -- i.e. the ky tap + 1-px height
    zero-pad of a 3x3 conv.  Block-diagonal per sample so batch can be folded
    into the GEMM M dimension without misaligned sublane slices."""
    rk = np.zeros((3, bm * h2, bm * h2), np.float32)
    for ky in range(3):
        for b in range(bm):
            for ho in range(h2):
                hi = ho + ky - 1
                if 0 <= hi < h2:
                    rk[ky, b * h2 + ho, b * h2 + hi] = 1.0
    return rk


def _row_upsample_matrix(h, bm):
    """(bm*2h, bm*h): nearest-neighbour 2x row upsample, block-diagonal per sample."""
    h2 = 2 * h
    r = np.zeros((bm * h2, bm * h), np.float32)
    for b in range(bm):
        for ho in range(h2):
            r[b * h2 + ho, b * h + ho // 2] = 1.0
    return r


def make_conv_bn_params(key, in_channels, out_channels, eps=1e-5):
    """Conv3x3(pad=1) + BatchNorm2d(eval) folded into a single (w, b) (HWIO)."""
    k_w, k_b, k_g, k_be, k_m, k_v = jax.random.split(key, 6)
    w = 0.1 * jax.random.normal(k_w, (3, 3, in_channels, out_channels), jnp.float32)
    conv_b = 0.1 * jax.random.normal(k_b, (out_channels,), jnp.float32)
    gamma = 1.0 + 0.1 * jax.random.normal(k_g, (out_channels,), jnp.float32)
    beta = 0.1 * jax.random.normal(k_be, (out_channels,), jnp.float32)
    mean = 0.1 * jax.random.normal(k_m, (out_channels,), jnp.float32)
    var = 1.0 + 0.1 * jax.random.uniform(k_v, (out_channels,), jnp.float32)
    scale = gamma / jnp.sqrt(var + eps)
    w_fold = w * scale[None, None, None, :]
    b_fold = (conv_b - mean) * scale + beta
    return np.asarray(w_fold), np.asarray(b_fold)


def prepare_upblock_params(layer_params, c_skip, c_x, h, w, bm):
    """Precompute every constant the fused kernel needs (bf16 MXU weights,
    f32 0/1 row matrices, folded-BN bias)."""
    assert len(layer_params) >= 2, "nb_Conv >= 2 expected"
    h2, w2 = 2 * h, 2 * w
    w1, _ = layer_params[0]
    cin1, cout = int(w1.shape[2]), int(w1.shape[3])
    assert cin1 == c_skip + c_x
    for wl, _ in layer_params[1:]:
        assert wl.shape[2] == cout and wl.shape[3] == cout

    # Layer 1 split into skip / up K-halves, then concatenated along K so the
    # channel concat (torch.cat([skip, up], dim=1)) is ONE fused GEMM per ky tap.
    t1_skip = _folded_tap_weights(w1[:, :, :c_skip, :], w2, upsample_w=False)
    t1_up = _folded_tap_weights(w1[:, :, c_skip:, :], w2, upsample_w=True)
    t1 = np.concatenate([t1_skip, t1_up], axis=1)          # (3, w2*c_skip + w*c_x, w2*cout)
    t_rest = np.concatenate(
        [_folded_tap_weights(wl, w2, upsample_w=False) for wl, _ in layer_params[1:]],
        axis=0)                                            # (3*(nb-1), w2*cout, w2*cout)
    bias = np.stack([np.tile(np.asarray(bl, np.float32), w2) for _, bl in layer_params])

    return dict(
        # MXU operands in bf16 (f32 accumulation in-kernel); exact 0/1 row
        # matrices and the folded bias stay f32 (bias-add/ReLU on f32 VPU path).
        t1=jnp.asarray(t1, jnp.bfloat16),
        t_rest=jnp.asarray(t_rest, jnp.bfloat16),
        bias=jnp.asarray(bias, jnp.float32),
        rk=jnp.asarray(_row_shift_matrices(h2, bm), jnp.float32),
        rup=jnp.asarray(_row_upsample_matrix(h, bm), jnp.float32),
        cout=cout,
        bm=bm,
    )


# ---------------------------------------------------------------------------
# Fused Pallas kernel: one grid step == one batch group, whole group in VMEM.
# ---------------------------------------------------------------------------
def _upblock_kernel(x_ref, skip_ref, rup_ref, rk_ref, t1_ref, trest_ref, b_ref, o_ref):
    dot = functools.partial(jnp.dot, preferred_element_type=jnp.float32)

    # 2x nearest row-upsample of the low-res input as an exact 0/1 matmul; the
    # upsampled tensor never touches HBM (width upsample + zero pad are already
    # folded into the bf16 GEMM weights host-side).
    x_up = dot(rup_ref[...], x_ref[...])                       # (M, w*c_x) f32

    # torch.cat([skip, up], dim=1) == a single in-VMEM lane concat, so layer 1
    # is one fused split-K GEMM per ky tap instead of two.
    act_b = jnp.concatenate([skip_ref[...], x_up], axis=1).astype(jnp.bfloat16)

    def conv_bn_relu(a_bf16, t_ref, base, layer):
        # 3x3 conv + folded BN + ReLU.  kx taps / width pad live in the bf16
        # GEMM weights (f32 accumulate); ky taps / height pad live in the tiny
        # pre-shifted f32 row matrices (no misaligned sublane slices, no
        # explicit zero accumulator).
        acc = dot(rk_ref[0], dot(a_bf16, t_ref[base + 0]))
        acc = acc + dot(rk_ref[1], dot(a_bf16, t_ref[base + 1]))
        acc = acc + dot(rk_ref[2], dot(a_bf16, t_ref[base + 2]))
        return jnp.maximum(acc + b_ref[layer:layer + 1, :], 0.0)

    act = conv_bn_relu(act_b, t1_ref, 0, 0)
    for li in range(trest_ref.shape[0] // 3):
        act = conv_bn_relu(act.astype(jnp.bfloat16), trest_ref, 3 * li, li + 1)

    # Lane-dense store: pack p row-chunks (= p samples at these shapes) side by
    # side on lanes so the output block is a full multiple of 128 lanes.
    p = o_ref.shape[1] // act.shape[1]
    if p > 1:
        m_c = act.shape[0] // p
        act = jnp.concatenate([act[j * m_c:(j + 1) * m_c, :] for j in range(p)], axis=1)
    o_ref[...] = act.astype(o_ref.dtype)


def upblock_attention_forward(x_nchw, skip_nchw, prep, single_buffer_consts=True):
    """UpblockAttention forward: NCHW in / NCHW out, like the PyTorch module."""
    n, c_x, h, w = x_nchw.shape
    n2, c_skip, h2, w2 = skip_nchw.shape
    assert n2 == n and h2 == 2 * h and w2 == 2 * w
    cout, bm = prep["cout"], prep["bm"]
    assert n % bm == 0
    n_groups = n // bm

    # NCHW -> row-GEMM layout: (batch, rows) folded onto sublanes, flattened
    # (w, c) on lanes.
    # TODO(synk): keep activations channels-last end-to-end in a full model so
    # these boundary transposes (the only extra HBM passes) disappear.
    x_rows = jnp.transpose(x_nchw, (0, 2, 3, 1)).reshape(n * h, w * c_x)
    skip_rows = jnp.transpose(skip_nchw, (0, 2, 3, 1)).reshape(n * h2, w2 * c_skip)

    lanes_out = w2 * cout
    m_rows = bm * h2
    # Lane-dense output packing factor (p samples packed along lanes).
    p = 1
    if lanes_out % 128 != 0 and 128 % lanes_out == 0:
        cand = 128 // lanes_out
        if bm % cand == 0 and m_rows % cand == 0:
            p = cand
    out_block = (m_rows // p, lanes_out * p)
    out_shape = jax.ShapeDtypeStruct((n_groups * out_block[0], out_block[1]), jnp.float32)

    const_names = ("rup", "rk", "t1", "t_rest", "bias")

    def const_spec(arr):
        idx = lambda i, nd=arr.ndim: (0,) * nd
        if single_buffer_consts:
            # Constant block index never changes across the grid -> single
            # buffer; halves resident constant VMEM (matters on v7x's 64 MiB).
            return pl.BlockSpec(arr.shape, idx, pipeline_mode=pl.Buffered(1))
        return pl.BlockSpec(arr.shape, idx)

    out = pl.pallas_call(
        _upblock_kernel,
        out_shape=out_shape,
        grid=(n_groups,),
        in_specs=[
            pl.BlockSpec((bm * h, w * c_x), lambda i: (i, 0)),
            pl.BlockSpec((m_rows, w2 * c_skip), lambda i: (i, 0)),
            *[const_spec(prep[k]) for k in const_names],
        ],
        out_specs=pl.BlockSpec(out_block, lambda i: (i, 0)),
        compiler_params=pltpu.CompilerParams(
            dimension_semantics=("parallel",),
            # TODO(synk): add H-strip (2-row halo) / W-strip grid axes before the
            # per-group working set outgrows this at production H/W/C.
            vmem_limit_bytes=32 * 1024 * 1024),
    )(x_rows, skip_rows, *[prep[k] for k in const_names])

    # Undo the lane packing and return NCHW like the PyTorch module.
    out = out.reshape(n_groups, bm // p, h2, p, w2, cout)
    out = out.transpose(0, 3, 1, 5, 2, 4).reshape(n, cout, h2, w2)
    return out


# ---------------------------------------------------------------------------
# Pure-JAX reference (same folded weights) for a correctness check.
# ---------------------------------------------------------------------------
def reference_forward(x_nchw, skip_nchw, layer_params):
    up = jnp.repeat(jnp.repeat(x_nchw, 2, axis=2), 2, axis=3)   # nearest upsample
    cat = jnp.concatenate([skip_nchw, up], axis=1)
    hcl = jnp.transpose(cat, (0, 2, 3, 1))                      # NHWC
    for wl, bl in layer_params:
        y = lax.conv_general_dilated(
            hcl, jnp.asarray(wl), window_strides=(1, 1), padding="SAME",
            dimension_numbers=("NHWC", "HWIO", "NHWC"),
            precision=lax.Precision.HIGHEST)
        hcl = jnp.maximum(y + jnp.asarray(bl), 0.0)
    return jnp.transpose(hcl, (0, 3, 1, 2))


if __name__ == "__main__":
    # Shapes consistent with the module:
    #   x:      (N=2, C=4,  8,  8)  -> upsampled to (2, 4, 16, 16)
    #   skip_x: (N=2, C=4, 16, 16)
    #   concat channels = 8 = in_channels; out_channels = 4; nb_Conv = 2
    N, C_x, H, W = 2, 4, 8, 8
    C_skip = 4
    in_channels = C_skip + C_x            # 8
    out_channels = 4
    nb_Conv = 2

    key = jax.random.PRNGKey(0)
    k_x, k_s, k_params = jax.random.split(key, 3)
    x = jax.random.normal(k_x, (N, C_x, H, W), dtype=jnp.float32)
    skip_x = jax.random.normal(k_s, (N, C_skip, 2 * H, 2 * W), dtype=jnp.float32)

    layer_keys = jax.random.split(k_params, nb_Conv)
    layer_params = [make_conv_bn_params(layer_keys[0], in_channels, out_channels)]
    for i in range(1, nb_Conv):
        layer_params.append(
            make_conv_bn_params(layer_keys[i], out_channels, out_channels))

    bm = 2 if N % 2 == 0 else 1           # pack 2 samples per grid step
    prep = prepare_upblock_params(layer_params, C_skip, C_x, H, W, bm=bm)

    def _run(single_buffer_consts):
        fwd = jax.jit(functools.partial(
            upblock_attention_forward, prep=prep,
            single_buffer_consts=single_buffer_consts))
        o = fwd(x, skip_x)
        jax.block_until_ready(o)
        return o

    try:
        out = _run(True)
    except Exception:
        # Fallback if this jax build rejects pl.Buffered(1) single-buffering.
        out = _run(False)

    assert out.shape == (N, out_channels, 2 * H, 2 * W), out.shape

    ref = reference_forward(x, skip_x, layer_params)
    max_err = float(jnp.max(jnp.abs(out - ref)))
    # bf16 MXU operands + f32 accumulation vs an f32 HIGHEST-precision reference.
    assert max_err < 5e-2, f"kernel/reference mismatch: max abs err = {max_err}"
    print("KERNEL_OK")
</pallas_src>

<mosaic_0001>
module attributes {stable_mosaic.version = 11 : i64} {
  func.func @_upblock_kernel(%arg0: i32, %arg1: memref<16x32xf32, #tpu.memory_space<vmem>>, %arg2: memref<32x64xf32, #tpu.memory_space<vmem>>, %arg3: memref<32x16xf32, #tpu.memory_space<vmem>>, %arg4: memref<3x32x32xf32, #tpu.memory_space<vmem>>, %arg5: memref<3x96x64xbf16, #tpu.memory_space<vmem>>, %arg6: memref<3x64x64xbf16, #tpu.memory_space<vmem>>, %arg7: memref<2x64xf32, #tpu.memory_space<vmem>>, %arg8: memref<16x128xf32, #tpu.memory_space<vmem>>) attributes {dimension_semantics = [#tpu.dimension_semantics<parallel>], iteration_bounds = array<i64: 1>, scalar_prefetch = 0 : i64, scratch_operands = 0 : i64, tpu.core_type = #tpu.core_type<tc>, window_params = [{transform_indices = @transform_0, window_bounds = array<i64: 16, 32>}, {transform_indices = @transform_1, window_bounds = array<i64: 32, 64>}, {pipeline_mode = #tpu.pipeline_mode<synchronous>, transform_indices = @transform_2, window_bounds = array<i64: 32, 16>}, {pipeline_mode = #tpu.pipeline_mode<synchronous>, transform_indices = @transform_3, window_bounds = array<i64: 3, 32, 32>}, {pipeline_mode = #tpu.pipeline_mode<synchronous>, transform_indices = @transform_4, window_bounds = array<i64: 3, 96, 64>}, {pipeline_mode = #tpu.pipeline_mode<synchronous>, transform_indices = @transform_5, window_bounds = array<i64: 3, 64, 64>}, {pipeline_mode = #tpu.pipeline_mode<synchronous>, transform_indices = @transform_6, window_bounds = array<i64: 2, 64>}, {transform_indices = @transform_7, window_bounds = array<i64: 16, 128>}]} {
    %c0 = arith.constant 0 : index
    %c0_0 = arith.constant 0 : index
    %0 = vector.load %arg3[%c0, %c0_0] : memref<32x16xf32, #tpu.memory_space<vmem>>, vector<32x16xf32>
    %c0_1 = arith.constant 0 : index
    %c0_2 = arith.constant 0 : index
    %1 = vector.load %arg1[%c0_1, %c0_2] : memref<16x32xf32, #tpu.memory_space<vmem>>, vector<16x32xf32>
    %cst = arith.constant dense<0.000000e+00> : vector<32x32xf32>
    %2 = tpu.matmul %0, %1, %cst {dimension_numbers = #tpu.dot_dimension_numbers<[1], [0], [0], [1], [0, 0, 1, 1], [], []>} : vector<32x16xf32>, vector<16x32xf32>, vector<32x32xf32> -> vector<32x32xf32>
    %c0_3 = arith.constant 0 : index
    %c0_4 = arith.constant 0 : index
    %3 = vector.load %arg2[%c0_3, %c0_4] : memref<32x64xf32, #tpu.memory_space<vmem>>, vector<32x64xf32>
    %4 = tpu.concatenate %3, %2 in 1 : vector<32x64xf32>, vector<32x32xf32> -> vector<32x96xf32>
    %5 = arith.truncf %4 : vector<32x96xf32> to vector<32x96xbf16>
    %c0_5 = arith.constant 0 : index
    %c0_6 = arith.constant 0 : index
    %c0_7 = arith.constant 0 : index
    %6 = vector.load %arg4[%c0_5, %c0_6, %c0_7] : memref<3x32x32xf32, #tpu.memory_space<vmem>>, vector<1x32x32xf32>
    %7 = vector.shape_cast %6 : vector<1x32x32xf32> to vector<32x32xf32>
    %c0_8 = arith.constant 0 : index
    %c0_9 = arith.constant 0 : index
    %c0_10 = arith.constant 0 : index
    %8 = vector.load %arg5[%c0_8, %c0_9, %c0_10] : memref<3x96x64xbf16, #tpu.memory_space<vmem>>, vector<1x96x64xbf16>
    %9 = vector.shape_cast %8 : vector<1x96x64xbf16> to vector<96x64xbf16>
    %cst_11 = arith.constant dense<0.000000e+00> : vector<32x64xf32>
    %10 = tpu.matmul %5, %9, %cst_11 {dimension_numbers = #tpu.dot_dimension_numbers<[1], [0], [0], [1], [0, 0, 1, 1], [], []>} : vector<32x96xbf16>, vector<96x64xbf16>, vector<32x64xf32> -> vector<32x64xf32>
    %cst_12 = arith.constant dense<0.000000e+00> : vector<32x64xf32>
    %11 = tpu.matmul %7, %10, %cst_12 {dimension_numbers = #tpu.dot_dimension_numbers<[1], [0], [0], [1], [0, 0, 1, 1], [], []>} : vector<32x32xf32>, vector<32x64xf32>, vector<32x64xf32> -> vector<32x64xf32>
    %c1 = arith.constant 1 : index
    %c0_13 = arith.constant 0 : index
    %c0_14 = arith.constant 0 : index
    %12 = vector.load %arg4[%c1, %c0_13, %c0_14] : memref<3x32x32xf32, #tpu.memory_space<vmem>>, vector<1x32x32xf32>
    %13 = vector.shape_cast %12 : vector<1x32x32xf32> to vector<32x32xf32>
    %c1_15 = arith.constant 1 : index
    %c0_16 = arith.constant 0 : index
    %c0_17 = arith.constant 0 : index
    %14 = vector.load %arg5[%c1_15, %c0_16, %c0_17] : memref<3x96x64xbf16, #tpu.memory_space<vmem>>, vector<1x96x64xbf16>
    %15 = vector.shape_cast %14 : vector<1x96x64xbf16> to vector<96x64xbf16>
    %cst_18 = arith.constant dense<0.000000e+00> : vector<32x64xf32>
    %16 = tpu.matmul %5, %15, %cst_18 {dimension_numbers = #tpu.dot_dimension_numbers<[1], [0], [0], [1], [0, 0, 1, 1], [], []>} : vector<32x96xbf16>, vector<96x64xbf16>, vector<32x64xf32> -> vector<32x64xf32>
    %cst_19 = arith.constant dense<0.000000e+00> : vector<32x64xf32>
    %17 = tpu.matmul %13, %16, %cst_19 {dimension_numbers = #tpu.dot_dimension_numbers<[1], [0], [0], [1], [0, 0, 1, 1], [], []>} : vector<32x32xf32>, vector<32x64xf32>, vector<32x64xf32> -> vector<32x64xf32>
    %18 = arith.addf %11, %17 : vector<32x64xf32>
    %c2 = arith.constant 2 : index
    %c0_20 = arith.constant 0 : index
    %c0_21 = arith.constant 0 : index
    %19 = vector.load %arg4[%c2, %c0_20, %c0_21] : memref<3x32x32xf32, #tpu.memory_space<vmem>>, vector<1x32x32xf32>
    %20 = vector.shape_cast %19 : vector<1x32x32xf32> to vector<32x32xf32>
    %c2_22 = arith.constant 2 : index
    %c0_23 = arith.constant 0 : index
    %c0_24 = arith.constant 0 : index
    %21 = vector.load %arg5[%c2_22, %c0_23, %c0_24] : memref<3x96x64xbf16, #tpu.memory_space<vmem>>, vector<1x96x64xbf16>
    %22 = vector.shape_cast %21 : vector<1x96x64xbf16> to vector<96x64xbf16>
    %cst_25 = arith.constant dense<0.000000e+00> : vector<32x64xf32>
    %23 = tpu.matmul %5, %22, %cst_25 {dimension_numbers = #tpu.dot_dimension_numbers<[1], [0], [0], [1], [0, 0, 1, 1], [], []>} : vector<32x96xbf16>, vector<96x64xbf16>, vector<32x64xf32> -> vector<32x64xf32>
    %cst_26 = arith.constant dense<0.000000e+00> : vector<32x64xf32>
    %24 = tpu.matmul %20, %23, %cst_26 {dimension_numbers = #tpu.dot_dimension_numbers<[1], [0], [0], [1], [0, 0, 1, 1], [], []>} : vector<32x32xf32>, vector<32x64xf32>, vector<32x64xf32> -> vector<32x64xf32>
    %25 = arith.addf %18, %24 : vector<32x64xf32>
    %c0_27 = arith.constant 0 : index
    %c0_28 = arith.constant 0 : index
    %26 = vector.load %arg7[%c0_27, %c0_28] : memref<2x64xf32, #tpu.memory_space<vmem>>, vector<1x64xf32>
    %27 = vector.broadcast %26 : vector<1x64xf32> to vector<32x64xf32>
    %28 = arith.addf %25, %27 : vector<32x64xf32>
    %cst_29 = arith.constant 0.000000e+00 : f32
    %29 = vector.broadcast %cst_29 : f32 to vector<32x64xf32>
    %30 = arith.maximumf %28, %29 : vector<32x64xf32>
    %31 = arith.truncf %30 : vector<32x64xf32> to vector<32x64xbf16>
    %c0_30 = arith.constant 0 : index
    %c0_31 = arith.constant 0 : index
    %c0_32 = arith.constant 0 : index
    %32 = vector.load %arg4[%c0_30, %c0_31, %c0_32] : memref<3x32x32xf32, #tpu.memory_space<vmem>>, vector<1x32x32xf32>
    %33 = vector.shape_cast %32 : vector<1x32x32xf32> to vector<32x32xf32>
    %c0_33 = arith.constant 0 : index
    %c0_34 = arith.constant 0 : index
    %c0_35 = arith.constant 0 : index
    %34 = vector.load %arg6[%c0_33, %c0_34, %c0_35] : memref<3x64x64xbf16, #tpu.memory_space<vmem>>, vector<1x64x64xbf16>
    %35 = vector.shape_cast %34 : vector<1x64x64xbf16> to vector<64x64xbf16>
    %cst_36 = arith.constant dense<0.000000e+00> : vector<32x64xf32>
    %36 = tpu.matmul %31, %35, %cst_36 {dimension_numbers = #tpu.dot_dimension_numbers<[1], [0], [0], [1], [0, 0, 1, 1], [], []>} : vector<32x64xbf16>, vector<64x64xbf16>, vector<32x64xf32> -> vector<32x64xf32>
    %cst_37 = arith.constant dense<0.000000e+00> : vector<32x64xf32>
    %37 = tpu.matmul %33, %36, %cst_37 {dimension_numbers = #tpu.dot_dimension_numbers<[1], [0], [0], [1], [0, 0, 1, 1], [], []>} : vector<32x32xf32>, vector<32x64xf32>, vector<32x64xf32> -> vector<32x64xf32>
    %c1_38 = arith.constant 1 : index
    %c0_39 = arith.constant 0 : index
    %c0_40 = arith.constant 0 : index
    %38 = vector.load %arg4[%c1_38, %c0_39, %c0_40] : memref<3x32x32xf32, #tpu.memory_space<vmem>>, vector<1x32x32xf32>
    %39 = vector.shape_cast %38 : vector<1x32x32xf32> to vector<32x32xf32>
    %c1_41 = arith.constant 1 : index
    %c0_42 = arith.constant 0 : index
    %c0_43 = arith.constant 0 : index
    %40 = vector.load %arg6[%c1_41, %c0_42, %c0_43] : memref<3x64x64xbf16, #tpu.memory_space<vmem>>, vector<1x64x64xbf16>
    %41 = vector.shape_cast %40 : vector<1x64x64xbf16> to vector<64x64xbf16>
    %cst_44 = arith.constant dense<0.000000e+00> : vector<32x64xf32>
    %42 = tpu.matmul %31, %41, %cst_44 {dimension_numbers = #tpu.dot_dimension_numbers<[1], [0], [0], [1], [0, 0, 1, 1], [], []>} : vector<32x64xbf16>, vector<64x64xbf16>, vector<32x64xf32> -> vector<32x64xf32>
    %cst_45 = arith.constant dense<0.000000e+00> : vector<32x64xf32>
    %43 = tpu.matmul %39, %42, %cst_45 {dimension_numbers = #tpu.dot_dimension_numbers<[1], [0], [0], [1], [0, 0, 1, 1], [], []>} : vector<32x32xf32>, vector<32x64xf32>, vector<32x64xf32> -> vector<32x64xf32>
    %44 = arith.addf %37, %43 : vector<32x64xf32>
    %c2_46 = arith.constant 2 : index
    %c0_47 = arith.constant 0 : index
    %c0_48 = arith.constant 0 : index
    %45 = vector.load %arg4[%c2_46, %c0_47, %c0_48] : memref<3x32x32xf32, #tpu.memory_space<vmem>>, vector<1x32x32xf32>
    %46 = vector.shape_cast %45 : vector<1x32x32xf32> to vector<32x32xf32>
    %c2_49 = arith.constant 2 : index
    %c0_50 = arith.constant 0 : index
    %c0_51 = arith.constant 0 : index
    %47 = vector.load %arg6[%c2_49, %c0_50, %c0_51] : memref<3x64x64xbf16, #tpu.memory_space<vmem>>, vector<1x64x64xbf16>
    %48 = vector.shape_cast %47 : vector<1x64x64xbf16> to vector<64x64xbf16>
    %cst_52 = arith.constant dense<0.000000e+00> : vector<32x64xf32>
    %49 = tpu.matmul %31, %48, %cst_52 {dimension_numbers = #tpu.dot_dimension_numbers<[1], [0], [0], [1], [0, 0, 1, 1], [], []>} : vector<32x64xbf16>, vector<64x64xbf16>, vector<32x64xf32> -> vector<32x64xf32>
    %cst_53 = arith.constant dense<0.000000e+00> : vector<32x64xf32>
    %50 = tpu.matmul %46, %49, %cst_53 {dimension_numbers = #tpu.dot_dimension_numbers<[1], [0], [0], [1], [0, 0, 1, 1], [], []>} : vector<32x32xf32>, vector<32x64xf32>, vector<32x64xf32> -> vector<32x64xf32>
    %51 = arith.addf %44, %50 : vector<32x64xf32>
    %c1_54 = arith.constant 1 : index
    %c0_55 = arith.constant 0 : index
    %52 = vector.load %arg7[%c1_54, %c0_55] : memref<2x64xf32, #tpu.memory_space<vmem>>, vector<1x64xf32>
    %53 = vector.broadcast %52 : vector<1x64xf32> to vector<32x64xf32>
    %54 = arith.addf %51, %53 : vector<32x64xf32>
    %cst_56 = arith.constant 0.000000e+00 : f32
    %55 = vector.broadcast %cst_56 : f32 to vector<32x64xf32>
    %56 = arith.maximumf %54, %55 : vector<32x64xf32>
    %57 = vector.extract_strided_slice %56 {offsets = [0, 0], sizes = [16, 64], strides = [1, 1]} : vector<32x64xf32> to vector<16x64xf32>
    %58 = vector.extract_strided_slice %56 {offsets = [16, 0], sizes = [16, 64], strides = [1, 1]} : vector<32x64xf32> to vector<16x64xf32>
    %59 = tpu.concatenate %57, %58 in 1 : vector<16x64xf32>, vector<16x64xf32> -> vector<16x128xf32>
    %c0_57 = arith.constant 0 : index
    %c0_58 = arith.constant 0 : index
    %60 = vector.load %arg8[%c0_57, %c0_58] : memref<16x128xf32, #tpu.memory_space<vmem>>, vector<16x128xf32>
    tpu.vector_store %arg8[%c0_57, %c0_58], %59 {strides = array<i32>} : memref<16x128xf32, #tpu.memory_space<vmem>>, vector<16x128xf32>,
    return
  }
  func.func @transform_0(%arg0: i32) -> (i32, i32) {
    %c0_i32 = arith.constant 0 : i32
    %c0_i32_0 = arith.constant 0 : i32
    return %arg0, %c0_i32 : i32, i32
  }
  func.func @transform_1(%arg0: i32) -> (i32, i32) {
    %c0_i32 = arith.constant 0 : i32
    %c0_i32_0 = arith.constant 0 : i32
    return %arg0, %c0_i32 : i32, i32
  }
  func.func @transform_2(%arg0: i32) -> (i32, i32) {
    %c0_i32 = arith.constant 0 : i32
    %c0_i32_0 = arith.constant 0 : i32
    %c0_i32_1 = arith.constant 0 : i32
    return %c0_i32, %c0_i32_0 : i32, i32
  }
  func.func @transform_3(%arg0: i32) -> (i32, i32, i32) {
    %c0_i32 = arith.constant 0 : i32
    %c0_i32_0 = arith.constant 0 : i32
    %c0_i32_1 = arith.constant 0 : i32
    %c0_i32_2 = arith.constant 0 : i32
    return %c0_i32, %c0_i32_0, %c0_i32_1 : i32, i32, i32
  }
  func.func @transform_4(%arg0: i32) -> (i32, i32, i32) {
    %c0_i32 = arith.constant 0 : i32
    %c0_i32_0 = arith.constant 0 : i32
    %c0_i32_1 = arith.constant 0 : i32
    %c0_i32_2 = arith.constant 0 : i32
    return %c0_i32, %c0_i32_0, %c0_i32_1 : i32, i32, i32
  }
  func.func @transform_5(%arg0: i32) -> (i32, i32, i32) {
    %c0_i32 = arith.constant 0 : i32
    %c0_i32_0 = arith.constant 0 : i32
    %c0_i32_1 = arith.constant 0 : i32
    %c0_i32_2 = arith.constant 0 : i32
    return %c0_i32, %c0_i32_0, %c0_i32_1 : i32, i32, i32
  }
  func.func @transform_6(%arg0: i32) -> (i32, i32) {
    %c0_i32 = arith.constant 0 : i32
    %c0_i32_0 = arith.constant 0 : i32
    %c0_i32_1 = arith.constant 0 : i32
    return %c0_i32, %c0_i32_0 : i32, i32
  }
  func.func @transform_7(%arg0: i32) -> (i32, i32) {
    %c0_i32 = arith.constant 0 : i32
    %c0_i32_0 = arith.constant 0 : i32
    return %arg0, %c0_i32 : i32, i32
  }
}

module attributes {stable_mosaic.version = 11 : i64} {
  func.func @_upblock_kernel(%arg0: i32, %arg1: memref<16x32xf32, #tpu.memory_space<vmem>>, %arg2: memref<32x64xf32, #tpu.memory_space<vmem>>, %arg3: memref<32x16xf32, #tpu.memory_space<vmem>>, %arg4: memref<3x32x32xf32, #tpu.memory_space<vmem>>, %arg5: memref<3x96x64xbf16, #tpu.memory_space<vmem>>, %arg6: memref<3x64x64xbf16, #tpu.memory_space<vmem>>, %arg7: memref<2x64xf32, #tpu.memory_space<vmem>>, %arg8: memref<16x128xf32, #tpu.memory_space<vmem>>) attributes {dimension_semantics = [#tpu.dimension_semantics<parallel>], iteration_bounds = array<i64: 1>, scalar_prefetch = 0 : i64, scratch_operands = 0 : i64, tpu.core_type = #tpu.core_type<tc>, window_params = [{transform_indices = @transform_0, window_bounds = array<i64: 16, 32>}, {transform_indices = @transform_1, window_bounds = array<i64: 32, 64>}, {pipeline_mode = #tpu.pipeline_mode<synchronous>, transform_indices = @transform_2, window_bounds = array<i64: 32, 16>}, {pipeline_mode = #tpu.pipeline_mode<synchronous>, transform_indices = @transform_3, window_bounds = array<i64: 3, 32, 32>}, {pipeline_mode = #tpu.pipeline_mode<synchronous>, transform_indices = @transform_4, window_bounds = array<i64: 3, 96, 64>}, {pipeline_mode = #tpu.pipeline_mode<synchronous>, transform_indices = @transform_5, window_bounds = array<i64: 3, 64, 64>}, {pipeline_mode = #tpu.pipeline_mode<synchronous>, transform_indices = @transform_6, window_bounds = array<i64: 2, 64>}, {transform_indices = @transform_7, window_bounds = array<i64: 16, 128>}]} {
    %c0 = arith.constant 0 : index
    %c0_0 = arith.constant 0 : index
    %0 = vector.load %arg3[%c0, %c0_0] : memref<32x16xf32, #tpu.memory_space<vmem>>, vector<32x16xf32>
    %c0_1 = arith.constant 0 : index
    %c0_2 = arith.constant 0 : index
    %1 = vector.load %arg1[%c0_1, %c0_2] : memref<16x32xf32, #tpu.memory_space<vmem>>, vector<16x32xf32>
    %cst = arith.constant dense<0.000000e+00> : vector<32x32xf32>
    %2 = tpu.matmul %0, %1, %cst {dimension_numbers = #tpu.dot_dimension_numbers<[1], [0], [0], [1], [0, 0, 1, 1], [], []>} : vector<32x16xf32>, vector<16x32xf32>, vector<32x32xf32> -> vector<32x32xf32>
    %c0_3 = arith.constant 0 : index
    %c0_4 = arith.constant 0 : index
    %3 = vector.load %arg2[%c0_3, %c0_4] : memref<32x64xf32, #tpu.memory_space<vmem>>, vector<32x64xf32>
    %4 = tpu.concatenate %3, %2 in 1 : vector<32x64xf32>, vector<32x32xf32> -> vector<32x96xf32>
    %5 = arith.truncf %4 : vector<32x96xf32> to vector<32x96xbf16>
    %c0_5 = arith.constant 0 : index
    %c0_6 = arith.constant 0 : index
    %c0_7 = arith.constant 0 : index
    %6 = vector.load %arg4[%c0_5, %c0_6, %c0_7] : memref<3x32x32xf32, #tpu.memory_space<vmem>>, vector<1x32x32xf32>
    %7 = vector.shape_cast %6 : vector<1x32x32xf32> to vector<32x32xf32>
    %c0_8 = arith.constant 0 : index
    %c0_9 = arith.constant 0 : index
    %c0_10 = arith.constant 0 : index
    %8 = vector.load %arg5[%c0_8, %c0_9, %c0_10] : memref<3x96x64xbf16, #tpu.memory_space<vmem>>, vector<1x96x64xbf16>
    %9 = vector.shape_cast %8 : vector<1x96x64xbf16> to vector<96x64xbf16>
    %cst_11 = arith.constant dense<0.000000e+00> : vector<32x64xf32>
    %10 = tpu.matmul %5, %9, %cst_11 {dimension_numbers = #tpu.dot_dimension_numbers<[1], [0], [0], [1], [0, 0, 1, 1], [], []>} : vector<32x96xbf16>, vector<96x64xbf16>, vector<32x64xf32> -> vector<32x64xf32>
    %cst_12 = arith.constant dense<0.000000e+00> : vector<32x64xf32>
    %11 = tpu.matmul %7, %10, %cst_12 {dimension_numbers = #tpu.dot_dimension_numbers<[1], [0], [0], [1], [0, 0, 1, 1], [], []>} : vector<32x32xf32>, vector<32x64xf32>, vector<32x64xf32> -> vector<32x64xf32>
    %c1 = arith.constant 1 : index
    %c0_13 = arith.constant 0 : index
    %c0_14 = arith.constant 0 : index
    %12 = vector.load %arg4[%c1, %c0_13, %c0_14] : memref<3x32x32xf32, #tpu.memory_space<vmem>>, vector<1x32x32xf32>
    %13 = vector.shape_cast %12 : vector<1x32x32xf32> to vector<32x32xf32>
    %c1_15 = arith.constant 1 : index
    %c0_16 = arith.constant 0 : index
    %c0_17 = arith.constant 0 : index
    %14 = vector.load %arg5[%c1_15, %c0_16, %c0_17] : memref<3x96x64xbf16, #tpu.memory_space<vmem>>, vector<1x96x64xbf16>
    %15 = vector.shape_cast %14 : vector<1x96x64xbf16> to vector<96x64xbf16>
    %cst_18 = arith.constant dense<0.000000e+00> : vector<32x64xf32>
    %16 = tpu.matmul %5, %15, %cst_18 {dimension_numbers = #tpu.dot_dimension_numbers<[1], [0], [0], [1], [0, 0, 1, 1], [], []>} : vector<32x96xbf16>, vector<96x64xbf16>, vector<32x64xf32> -> vector<32x64xf32>
    %cst_19 = arith.constant dense<0.000000e+00> : vector<32x64xf32>
    %17 = tpu.matmul %13, %16, %cst_19 {dimension_numbers = #tpu.dot_dimension_numbers<[1], [0], [0], [1], [0, 0, 1, 1], [], []>} : vector<32x32xf32>, vector<32x64xf32>, vector<32x64xf32> -> vector<32x64xf32>
    %18 = arith.addf %11, %17 : vector<32x64xf32>
    %c2 = arith.constant 2 : index
    %c0_20 = arith.constant 0 : index
    %c0_21 = arith.constant 0 : index
    %19 = vector.load %arg4[%c2, %c0_20, %c0_21] : memref<3x32x32xf32, #tpu.memory_space<vmem>>, vector<1x32x32xf32>
    %20 = vector.shape_cast %19 : vector<1x32x32xf32> to vector<32x32xf32>
    %c2_22 = arith.constant 2 : index
    %c0_23 = arith.constant 0 : index
    %c0_24 = arith.constant 0 : index
    %21 = vector.load %arg5[%c2_22, %c0_23, %c0_24] : memref<3x96x64xbf16, #tpu.memory_space<vmem>>, vector<1x96x64xbf16>
    %22 = vector.shape_cast %21 : vector<1x96x64xbf16> to vector<96x64xbf16>
    %cst_25 = arith.constant dense<0.000000e+00> : vector<32x64xf32>
    %23 = tpu.matmul %5, %22, %cst_25 {dimension_numbers = #tpu.dot_dimension_numbers<[1], [0], [0], [1], [0, 0, 1, 1], [], []>} : vector<32x96xbf16>, vector<96x64xbf16>, vector<32x64xf32> -> vector<32x64xf32>
    %cst_26 = arith.constant dense<0.000000e+00> : vector<32x64xf32>
    %24 = tpu.matmul %20, %23, %cst_26 {dimension_numbers = #tpu.dot_dimension_numbers<[1], [0], [0], [1], [0, 0, 1, 1], [], []>} : vector<32x32xf32>, vector<32x64xf32>, vector<32x64xf32> -> vector<32x64xf32>
    %25 = arith.addf %18, %24 : vector<32x64xf32>
    %c0_27 = arith.constant 0 : index
    %c0_28 = arith.constant 0 : index
    %26 = vector.load %arg7[%c0_27, %c0_28] : memref<2x64xf32, #tpu.memory_space<vmem>>, vector<1x64xf32>
    %27 = vector.broadcast %26 : vector<1x64xf32> to vector<32x64xf32>
    %28 = arith.addf %25, %27 : vector<32x64xf32>
    %cst_29 = arith.constant 0.000000e+00 : f32
    %29 = vector.broadcast %cst_29 : f32 to vector<32x64xf32>
    %30 = arith.maximumf %28, %29 : vector<32x64xf32>
    %31 = arith.truncf %30 : vector<32x64xf32> to vector<32x64xbf16>
    %c0_30 = arith.constant 0 : index
    %c0_31 = arith.constant 0 : index
    %c0_32 = arith.constant 0 : index
    %32 = vector.load %arg4[%c0_30, %c0_31, %c0_32] : memref<3x32x32xf32, #tpu.memory_space<vmem>>, vector<1x32x32xf32>
    %33 = vector.shape_cast %32 : vector<1x32x32xf32> to vector<32x32xf32>
    %c0_33 = arith.constant 0 : index
    %c0_34 = arith.constant 0 : index
    %c0_35 = arith.constant 0 : index
    %34 = vector.load %arg6[%c0_33, %c0_34, %c0_35] : memref<3x64x64xbf16, #tpu.memory_space<vmem>>, vector<1x64x64xbf16>
    %35 = vector.shape_cast %34 : vector<1x64x64xbf16> to vector<64x64xbf16>
    %cst_36 = arith.constant dense<0.000000e+00> : vector<32x64xf32>
    %36 = tpu.matmul %31, %35, %cst_36 {dimension_numbers = #tpu.dot_dimension_numbers<[1], [0], [0], [1], [0, 0, 1, 1], [], []>} : vector<32x64xbf16>, vector<64x64xbf16>, vector<32x64xf32> -> vector<32x64xf32>
    %cst_37 = arith.constant dense<0.000000e+00> : vector<32x64xf32>
    %37 = tpu.matmul %33, %36, %cst_37 {dimension_numbers = #tpu.dot_dimension_numbers<[1], [0], [0], [1], [0, 0, 1, 1], [], []>} : vector<32x32xf32>, vector<32x64xf32>, vector<32x64xf32> -> vector<32x64xf32>
    %c1_38 = arith.constant 1 : index
    %c0_39 = arith.constant 0 : index
    %c0_40 = arith.constant 0 : index
    %38 = vector.load %arg4[%c1_38, %c0_39, %c0_40] : memref<3x32x32xf32, #tpu.memory_space<vmem>>, vector<1x32x32xf32>
    %39 = vector.shape_cast %38 : vector<1x32x32xf32> to vector<32x32xf32>
    %c1_41 = arith.constant 1 : index
    %c0_42 = arith.constant 0 : index
    %c0_43 = arith.constant 0 : index
    %40 = vector.load %arg6[%c1_41, %c0_42, %c0_43] : memref<3x64x64xbf16, #tpu.memory_space<vmem>>, vector<1x64x64xbf16>
    %41 = vector.shape_cast %40 : vector<1x64x64xbf16> to vector<64x64xbf16>
    %cst_44 = arith.constant dense<0.000000e+00> : vector<32x64xf32>
    %42 = tpu.matmul %31, %41, %cst_44 {dimension_numbers = #tpu.dot_dimension_numbers<[1], [0], [0], [1], [0, 0, 1, 1], [], []>} : vector<32x64xbf16>, vector<64x64xbf16>, vector<32x64xf32> -> vector<32x64xf32>
    %cst_45 = arith.constant dense<0.000000e+00> : vector<32x64xf32>
    %43 = tpu.matmul %39, %42, %cst_45 {dimension_numbers = #tpu.dot_dimension_numbers<[1], [0], [0], [1], [0, 0, 1, 1], [], []>} : vector<32x32xf32>, vector<32x64xf32>, vector<32x64xf32> -> vector<32x64xf32>
    %44 = arith.addf %37, %43 : vector<32x64xf32>
    %c2_46 = arith.constant 2 : index
    %c0_47 = arith.constant 0 : index
    %c0_48 = arith.constant 0 : index
    %45 = vector.load %arg4[%c2_46, %c0_47, %c0_48] : memref<3x32x32xf32, #tpu.memory_space<vmem>>, vector<1x32x32xf32>
    %46 = vector.shape_cast %45 : vector<1x32x32xf32> to vector<32x32xf32>
    %c2_49 = arith.constant 2 : index
    %c0_50 = arith.constant 0 : index
    %c0_51 = arith.constant 0 : index
    %47 = vector.load %arg6[%c2_49, %c0_50, %c0_51] : memref<3x64x64xbf16, #tpu.memory_space<vmem>>, vector<1x64x64xbf16>
    %48 = vector.shape_cast %47 : vector<1x64x64xbf16> to vector<64x64xbf16>
    %cst_52 = arith.constant dense<0.000000e+00> : vector<32x64xf32>
    %49 = tpu.matmul %31, %48, %cst_52 {dimension_numbers = #tpu.dot_dimension_numbers<[1], [0], [0], [1], [0, 0, 1, 1], [], []>} : vector<32x64xbf16>, vector<64x64xbf16>, vector<32x64xf32> -> vector<32x64xf32>
    %cst_53 = arith.constant dense<0.000000e+00> : vector<32x64xf32>
    %50 = tpu.matmul %46, %49, %cst_53 {dimension_numbers = #tpu.dot_dimension_numbers<[1], [0], [0], [1], [0, 0, 1, 1], [], []>} : vector<32x32xf32>, vector<32x64xf32>, vector<32x64xf32> -> vector<32x64xf32>
    %51 = arith.addf %44, %50 : vector<32x64xf32>
    %c1_54 = arith.constant 1 : index
    %c0_55 = arith.constant 0 : index
    %52 = vector.load %arg7[%c1_54, %c0_55] : memref<2x64xf32, #tpu.memory_space<vmem>>, vector<1x64xf32>
    %53 = vector.broadcast %52 : vector<1x64xf32> to vector<32x64xf32>
    %54 = arith.addf %51, %53 : vector<32x64xf32>
    %cst_56 = arith.constant 0.000000e+00 : f32
    %55 = vector.broadcast %cst_56 : f32 to vector<32x64xf32>
    %56 = arith.maximumf %54, %55 : vector<32x64xf32>
    %57 = vector.extract_strided_slice %56 {offsets = [0, 0], sizes = [16, 64], strides = [1, 1]} : vector<32x64xf32> to vector<16x64xf32>
    %58 = vector.extract_strided_slice %56 {offsets = [16, 0], sizes = [16, 64], strides = [1, 1]} : vector<32x64xf32> to vector<16x64xf32>
    %59 = tpu.concatenate %57, %58 in 1 : vector<16x64xf32>, vector<16x64xf32> -> vector<16x128xf32>
    %c0_57 = arith.constant 0 : index
    %c0_58 = arith.constant 0 : index
    %60 = vector.load %arg8[%c0_57, %c0_58] : memref<16x128xf32, #tpu.memory_space<vmem>>, vector<16x128xf32>
    tpu.vector_store %arg8[%c0_57, %c0_58], %59 {strides = array<i32>} : memref<16x128xf32, #tpu.memory_space<vmem>>, vector<16x128xf32>,
    return
  }
  func.func @transform_0(%arg0: i32) -> (i32, i32) {
    %c0_i32 = arith.constant 0 : i32
    %c0_i32_0 = arith.constant 0 : i32
    return %arg0, %c0_i32 : i32, i32
  }
  func.func @transform_1(%arg0: i32) -> (i32, i32) {
    %c0_i32 = arith.constant 0 : i32
    %c0_i32_0 = arith.constant 0 : i32
    return %arg0, %c0_i32 : i32, i32
  }
  func.func @transform_2(%arg0: i32) -> (i32, i32) {
    %c0_i32 = arith.constant 0 : i32
    %c0_i32_0 = arith.constant 0 : i32
    %c0_i32_1 = arith.constant 0 : i32
    return %c0_i32, %c0_i32_0 : i32, i32
  }
  func.func @transform_3(%arg0: i32) -> (i32, i32, i32) {
    %c0_i32 = arith.constant 0 : i32
    %c0_i32_0 = arith.constant 0 : i32
    %c0_i32_1 = arith.constant 0 : i32
    %c0_i32_2 = arith.constant 0 : i32
    return %c0_i32, %c0_i32_0, %c0_i32_1 : i32, i32, i32
  }
  func.func @transform_4(%arg0: i32) -> (i32, i32, i32) {
    %c0_i32 = arith.constant 0 : i32
    %c0_i32_0 = arith.constant 0 : i32
    %c0_i32_1 = arith.constant 0 : i32
    %c0_i32_2 = arith.constant 0 : i32
    return %c0_i32, %c0_i32_0, %c0_i32_1 : i32, i32, i32
  }
  func.func @transform_5(%arg0: i32) -> (i32, i32, i32) {
    %c0_i32 = arith.constant 0 : i32
    %c0_i32_0 = arith.constant 0 : i32
    %c0_i32_1 = arith.constant 0 : i32
    %c0_i32_2 = arith.constant 0 : i32
    return %c0_i32, %c0_i32_0, %c0_i32_1 : i32, i32, i32
  }
  func.func @transform_6(%arg0: i32) -> (i32, i32) {
    %c0_i32 = arith.constant 0 : i32
    %c0_i32_0 = arith.constant 0 : i32
    %c0_i32_1 = arith.constant 0 : i32
    return %c0_i32, %c0_i32_0 : i32, i32
  }
  func.func @transform_7(%arg0: i32) -> (i32, i32) {
    %c0_i32 = arith.constant 0 : i32
    %c0_i32_0 = arith.constant 0 : i32
    return %arg0, %c0_i32 : i32, i32
  }
}

</mosaic_0001>

<llo_original>
// kernel: upblock_attention_forward.1
$region0: #{upblock_attention_forward.1}
  #allocation0 [shape = 'u32[]', space=smem, size = 0x4, offset = 0x4, fixed_abs, tag = 'smem constant byte address 0x4 - core index']
  #allocation1 [shape = 'u32[144,128]{1,0:T(1,128)}', space=vmem, size = 0x12000, scoped, tag = 'internal scratch']
  %s0 = inlined_call_operand.vmem [shape: f32[16,32], index: 0, kind: input, shape index: {}]
  %s1 = inlined_call_operand.vmem [shape: f32[32,64], index: 1, kind: input, shape index: {}]
  %s2 = inlined_call_operand.vmem [shape: f32[32,16], index: 2, kind: input, shape index: {}]
  %s3 = inlined_call_operand.vmem [shape: f32[3,32,32], index: 3, kind: input, shape index: {}]
  %s4 = inlined_call_operand.vmem [shape: bf16[3,96,64], index: 4, kind: input, shape index: {}]
  %s5 = inlined_call_operand.vmem [shape: bf16[3,64,64], index: 5, kind: input, shape index: {}]
  %s6 = inlined_call_operand.vmem [shape: f32[2,64], index: 6, kind: input, shape index: {}]
  %s7 = inlined_call_operand.vmem [shape: f32[16,128], index: 7, kind: output, shape index: {}]
  %s8 = sld [smem:[#allocation0]]
  $region38: #{upblock_attention_forward.1} parent=0
    _
  %s10 = ssub.s32 1, %s8
  %s11 = scalar_select 0, %s10, %s8
  // Predicated region
  $region2: #{upblock_attention_forward.1} parent=0 // pred_check
    _
  $region3: #{upblock_attention_forward.1} parent=0 // pred_check_branch
    %13 = sbr.rel (0) target = $region5
  $region4: #{upblock_attention_forward.1} parent=0 // pred_region
    _
  $region5: #{upblock_attention_forward.1} parent=0 // pred_fallthru
    _
  // Predicated region
  $region6: #{upblock_attention_forward.1} parent=0 // pred_check
    _
  $region7: #{upblock_attention_forward.1} parent=0 // pred_check_branch
    %15 = sbr.rel (0) target = $region9
  $region8: #{upblock_attention_forward.1} parent=0 // pred_region
    _
  $region9: #{upblock_attention_forward.1} parent=0 // pred_fallthru
    _
  // Predicated region
  $region10: #{upblock_attention_forward.1} parent=0 // pred_check
    _
  $region11: #{upblock_attention_forward.1} parent=0 // pred_check_branch
    %17 = sbr.rel (0) target = $region13
  $region12: #{upblock_attention_forward.1} parent=0 // pred_region
    _
  $region13: #{upblock_attention_forward.1} parent=0 // pred_fallthru
    _
  // Predicated region
  $region14: #{upblock_attention_forward.1} parent=0 // pred_check
    _
  $region15: #{upblock_attention_forward.1} parent=0 // pred_check_branch
    %19 = sbr.rel (0) target = $region17
  $region16: #{upblock_attention_forward.1} parent=0 // pred_region
    _
  $region17: #{upblock_attention_forward.1} parent=0 // pred_fallthru
    _
  // Predicated region
  $region18: #{upblock_attention_forward.1} parent=0 // pred_check
    _
  $region19: #{upblock_attention_forward.1} parent=0 // pred_check_branch
    %21 = sbr.rel (0) target = $region21
  $region20: #{upblock_attention_forward.1} parent=0 // pred_region
    _
  $region21: #{upblock_attention_forward.1} parent=0 // pred_fallthru
    _
  // Predicated region
  $region22: #{upblock_attention_forward.1} parent=0 // pred_check
    _
  $region23: #{upblock_attention_forward.1} parent=0 // pred_check_branch
    %23 = sbr.rel (0) target = $region25
  $region24: #{upblock_attention_forward.1} parent=0 // pred_region
    _
  $region25: #{upblock_attention_forward.1} parent=0 // pred_fallthru
    _
  // Predicated region
  $region26: #{upblock_attention_forward.1} parent=0 // pred_check
    _
  $region27: #{upblock_attention_forward.1} parent=0 // pred_check_branch
    %25 = sbr.rel (0) target = $region29
  $region28: #{upblock_attention_forward.1} parent=0 // pred_region
    _
  $region29: #{upblock_attention_forward.1} parent=0 // pred_fallthru
    _
  %v27 = vld [vmem:[%s2] sm:$0xff]
  %v28 = vld [vmem:[%s2 + $0x8] sm:$0xff]
  %v29 = vld [vmem:[%s2 + $0x10] sm:$0xff]
  %v30 = vld [vmem:[%s2 + $0x18] sm:$0xff]
  %v31 = vld [vmem:[%s0] sm:$0xff]
  %v32 = vld [vmem:[%s0 + $0x8] sm:$0xff]
  %vm33 = vcmask 130048
  %v35 = vsel %vm33, %v27, 0
  %v38 = vsel %vm33, %v28, 0
  %v41 = vsel %vm33, %v29, 0
  %v44 = vsel %vm33, %v30, 0
  %46 = vmatprep.subr.mxu0 0.0
  %47 = vmatpush1.msra.mxu0 0.0
  %48 = vmatprep.subr.mxu0 0.0
  %49 = vmatpush1.msra.mxu0 0.0
  %50 = vmatprep.subr.mxu0 0.0
  %51 = vmatpush1.msra.mxu0 0.0
  %52 = vmatprep.subr.mxu0 0.0
  %53 = vmatpush1.msra.mxu0 0.0
  %54 = vmatprep.subr.mxu0 0.0
  %55 = vmatpush1.msra.mxu0 0.0
  %56 = vmatprep.subr.mxu0 0.0
  %57 = vmatpush1.msra.mxu0 0.0
  %58 = vmatprep.subr.mxu0 0.0
  %59 = vmatpush1.msra.mxu0 0.0
  %60 = vmatprep.subr.mxu0 0.0
  %61 = vmatpush1.msra.mxu0 0.0
  %62 = vmatprep.subr.mxu0 0.0
  %63 = vmatpush1.msra.mxu0 0.0
  %64 = vmatprep.subr.mxu0 0.0
  %65 = vmatpush1.msra.mxu0 0.0
  %66 = vmatprep.subr.mxu0 0.0
  %67 = vmatpush1.msra.mxu0 0.0
  %68 = vmatprep.subr.mxu0 0.0
  %69 = vmatpush1.msra.mxu0 0.0
  %70 = vmatprep.subr.mxu0 0.0
  %71 = vmatpush1.msra.mxu0 0.0
  %72 = vmatprep.subr.mxu0 0.0
  %73 = vmatpush1.msra.mxu0 0.0
  %74 = vmatprep.subr.mxu0 0.0
  %75 = vmatpush1.msra.mxu0 %v32
  %76 = vmatprep.subr.mxu0 0.0
  %77 = vmatpush1.msra.mxu0 %v31
  %78 = vmatprep.subr.mxu0 0.0
  %79 = vmatpush2.msra.mxu0 0.0
  %80 = vmatprep.subr.mxu0 0.0
  %81 = vmatpush2.msra.mxu0 0.0
  %82 = vmatprep.subr.mxu0 0.0
  %83 = vmatpush2.msra.mxu0 0.0
  %84 = vmatprep.subr.mxu0 0.0
  %85 = vmatpush2.msra.mxu0 0.0
  %86 = vmatprep.subr.mxu0 0.0
  %87 = vmatpush2.msra.mxu0 0.0
  %88 = vmatprep.subr.mxu0 0.0
  %89 = vmatpush2.msra.mxu0 0.0
  %90 = vmatprep.subr.mxu0 0.0
  %91 = vmatpush2.msra.mxu0 0.0
  %92 = vmatprep.subr.mxu0 0.0
  %93 = vmatpush2.msra.mxu0 0.0
  %94 = vmatprep.subr.mxu0 0.0
  %95 = vmatpush2.msra.mxu0 0.0
  %96 = vmatprep.subr.mxu0 0.0
  %97 = vmatpush2.msra.mxu0 0.0
  %98 = vmatprep.subr.mxu0 0.0
  %99 = vmatpush2.msra.mxu0 0.0
  %100 = vmatprep.subr.mxu0 0.0
  %101 = vmatpush2.msra.mxu0 0.0
  %102 = vmatprep.subr.mxu0 0.0
  %103 = vmatpush2.msra.mxu0 0.0
  %104 = vmatprep.subr.mxu0 0.0
  %105 = vmatpush2.msra.mxu0 0.0
  %106 = vmatprep.subr.mxu0 0.0
  %107 = vmatpush2.msra.mxu0 0.0
  %108 = vmatprep.subr.mxu0 0.0
  %109 = vmatpush2.msra.mxu0 0.0
  %110 = vmatprep.mubr.f32.mxu0 0.0
  %111 = vmatmul.mubr.f32.gmra.mxu0 %v35
  %v112 = vpop.f32.mrf.mxu0
  %v113 = vadd.f32 0.0, %v112
  %v114 = vpop.f32.mrf.mxu0
  %115 = vmatprep.mubr.f32.mxu0 0.0
  %116 = vmatmul.mubr.f32.gmra.mxu0 %v38
  %v117 = vpop.f32.mrf.mxu0
  %v118 = vadd.f32 0.0, %v117
  %v119 = vpop.f32.mrf.mxu0
  %120 = vmatprep.mubr.f32.mxu0 0.0
  %121 = vmatmul.mubr.f32.gmra.mxu0 %v41
  %v122 = vpop.f32.mrf.mxu0
  %v123 = vadd.f32 0.0, %v122
  %v124 = vpop.f32.mrf.mxu0
  %125 = vmatprep.mubr.f32.mxu0 0.0
  %126 = vmatmul.mubr.f32.gmra.mxu0 %v44
  %v127 = vpop.f32.mrf.mxu0
  %v128 = vadd.f32 0.0, %v127
  %v129 = vpop.f32.mrf.mxu0
  %130 = vdwg.mxu0
  %v131 = vld [vmem:[%s1] sm:$0xff]
  %v132 = vld [vmem:[%s1 + $0x8] sm:$0xff]
  %v133 = vld [vmem:[%s1 + $0x10] sm:$0xff]
  %v134 = vld [vmem:[%s1 + $0x18] sm:$0xff]
  %139 = vrot.lane.b32.xlu0 %v113, 64
  %v140 = vpop.permute.xlu0 %139
  %141 = vrot.lane.b32.xlu0 %v118, 64
  %v142 = vpop.permute.xlu0 %141
  %143 = vrot.lane.b32.xlu0 %v123, 64
  %v144 = vpop.permute.xlu0 %143
  %145 = vrot.lane.b32.xlu0 %v128, 64
  %v146 = vpop.permute.xlu0 %145
  %vm151 = vcmask 523264
  %v152 = vsel %vm151, %v131, %v140
  %v153 = vsel %vm151, %v132, %v142
  %v154 = vsel %vm151, %v133, %v144
  %v155 = vsel %vm151, %v134, %v146
  %v156 = vpack.c.bf16 %v153, %v152
  %v157 = vpack.c.bf16 %v155, %v154
  %v158 = vld [vmem:[%s3] sm:$0xff]
  %v159 = vld [vmem:[%s3 + $0x8] sm:$0xff]
  %v160 = vld [vmem:[%s3 + $0x10] sm:$0xff]
  %v161 = vld [vmem:[%s3 + $0x18] sm:$0xff]
  %v162 = vld [vmem:[%s4] sm:$0xf]
  %v163 = vld [vmem:[%s4 + $0x4] sm:$0xf]
  %v164 = vld [vmem:[%s4 + $0x8] sm:$0xf]
  %v165 = vld [vmem:[%s4 + $0xc] sm:$0xf]
  %v166 = vld [vmem:[%s4 + $0x10] sm:$0xf]
  %v167 = vld [vmem:[%s4 + $0x14] sm:$0xf]
  %v168 = vld [vmem:[%s4 + $0x18] sm:$0xf]
  %v169 = vld [vmem:[%s4 + $0x1c] sm:$0xf]
  %v170 = vld [vmem:[%s4 + $0x20] sm:$0xf]
  %v171 = vld [vmem:[%s4 + $0x24] sm:$0xf]
  %v172 = vld [vmem:[%s4 + $0x28] sm:$0xf]
  %v173 = vld [vmem:[%s4 + $0x2c] sm:$0xf]
  %v186 = vunpack.c.l.b16 %v162
  %v187 = vunpack.c.l.b16 %v163
  %v188 = vunpack.c.l.b16 %v164
  %v189 = vunpack.c.l.b16 %v165
  %v190 = vunpack.c.l.b16 %v166
  %v191 = vunpack.c.l.b16 %v167
  %v192 = vunpack.c.l.b16 %v168
  %v193 = vunpack.c.l.b16 %v169
  %v194 = vunpack.c.l.b16 %v170
  %v195 = vunpack.c.l.b16 %v171
  %v196 = vunpack.c.l.b16 %v172
  %v197 = vunpack.c.l.b16 %v173
  %v198 = vpack.c.b16 %v187, %v186
  %v199 = vpack.c.b16 %v189, %v188
  %v200 = vpack.c.b16 %v191, %v190
  %v201 = vpack.c.b16 %v193, %v192
  %v202 = vpack.c.b16 %v195, %v194
  %v203 = vpack.c.b16 %v197, %v196
  %vm210 = vcmask 785408
  %v212 = vsel %vm210, %v156, 0
  %v215 = vsel %vm210, %v157, 0
  %217 = vmatprep.subr.bf16.mxu0 0
  %218 = vmatpush1.bf16.msra.mxu0 0
  %219 = vmatprep.subr.bf16.mxu0 0
  %220 = vmatpush1.bf16.msra.mxu0 0
  %221 = vmatprep.subr.bf16.mxu0 0
  %222 = vmatpush1.bf16.msra.mxu0 %v203
  %223 = vmatprep.subr.bf16.mxu0 0
  %224 = vmatpush1.bf16.msra.mxu0 %v202
  %225 = vmatprep.subr.bf16.mxu0 0
  %226 = vmatpush1.bf16.msra.mxu0 %v201
  %227 = vmatprep.subr.bf16.mxu0 0
  %228 = vmatpush1.bf16.msra.mxu0 %v200
  %229 = vmatprep.subr.bf16.mxu0 0
  %230 = vmatpush1.bf16.msra.mxu0 %v199
  %231 = vmatprep.subr.bf16.mxu0 0
  %232 = vmatpush1.bf16.msra.mxu0 %v198
  %233 = vmatprep.subr.bf16.mxu0 0
  %234 = vmatpush2.bf16.msra.mxu0 0
  %235 = vmatprep.subr.bf16.mxu0 0
  %236 = vmatpush2.bf16.msra.mxu0 0
  %237 = vmatprep.subr.bf16.mxu0 0
  %238 = vmatpush2.bf16.msra.mxu0 0
  %239 = vmatprep.subr.bf16.mxu0 0
  %240 = vmatpush2.bf16.msra.mxu0 0
  %241 = vmatprep.subr.bf16.mxu0 0
  %242 = vmatpush2.bf16.msra.mxu0 0
  %243 = vmatprep.subr.bf16.mxu0 0
  %244 = vmatpush2.bf16.msra.mxu0 0
  %245 = vmatprep.subr.bf16.mxu0 0
  %246 = vmatpush2.bf16.msra.mxu0 0
  %247 = vmatprep.subr.bf16.mxu0 0
  %248 = vmatpush2.bf16.msra.mxu0 0
  %249 = vmatprep.mubr.bf16.mxu0 0
  %250 = vmatmul.mubr.bf16.gmra.mxu0 %v212
  %v251 = vpop.f32.mrf.mxu0
  %v252 = vadd.f32 0.0, %v251
  %v253 = vpop.f32.mrf.mxu0
  %v254 = vpop.f32.mrf.mxu0
  %v255 = vadd.f32 0.0, %v254
  %v256 = vpop.f32.mrf.mxu0
  %257 = vmatprep.mubr.bf16.mxu0 0
  %258 = vmatmul.mubr.bf16.gmra.mxu0 %v215
  %v259 = vpop.f32.mrf.mxu0
  %v260 = vadd.f32 0.0, %v259
  %v261 = vpop.f32.mrf.mxu0
  %v262 = vpop.f32.mrf.mxu0
  %v263 = vadd.f32 0.0, %v262
  %v264 = vpop.f32.mrf.mxu0
  %265 = vdwg.mxu0
  %s266 = scalar_lea.vmem %s3, 32
  %v267 = vld [vmem:[%s266] sm:$0xff]
  %v268 = vld [vmem:[%s266 + $0x8] sm:$0xff]
  %v269 = vld [vmem:[%s266 + $0x10] sm:$0xff]
  %v270 = vld [vmem:[%s266 + $0x18] sm:$0xff]
  %s271 = scalar_lea.vmem %s4, 48
  %v272 = vld [vmem:[%s271] sm:$0xf]
  %v273 = vld [vmem:[%s271 + $0x4] sm:$0xf]
  %v274 = vld [vmem:[%s271 + $0x8] sm:$0xf]
  %v275 = vld [vmem:[%s271 + $0xc] sm:$0xf]
  %v276 = vld [vmem:[%s271 + $0x10] sm:$0xf]
  %v277 = vld [vmem:[%s271 + $0x14] sm:$0xf]
  %v278 = vld [vmem:[%s271 + $0x18] sm:$0xf]
  %v279 = vld [vmem:[%s271 + $0x1c] sm:$0xf]
  %v280 = vld [vmem:[%s271 + $0x20] sm:$0xf]
  %v281 = vld [vmem:[%s271 + $0x24] sm:$0xf]
  %v282 = vld [vmem:[%s271 + $0x28] sm:$0xf]
  %v283 = vld [vmem:[%s271 + $0x2c] sm:$0xf]
  %v296 = vunpack.c.l.b16 %v272
  %v297 = vunpack.c.l.b16 %v273
  %v298 = vunpack.c.l.b16 %v274
  %v299 = vunpack.c.l.b16 %v275
  %v300 = vunpack.c.l.b16 %v276
  %v301 = vunpack.c.l.b16 %v277
  %v302 = vunpack.c.l.b16 %v278
  %v303 = vunpack.c.l.b16 %v279
  %v304 = vunpack.c.l.b16 %v280
  %v305 = vunpack.c.l.b16 %v281
  %v306 = vunpack.c.l.b16 %v282
  %v307 = vunpack.c.l.b16 %v283
  %v308 = vpack.c.b16 %v297, %v296
  %v309 = vpack.c.b16 %v299, %v298
  %v310 = vpack.c.b16 %v301, %v300
  %v311 = vpack.c.b16 %v303, %v302
  %v312 = vpack.c.b16 %v305, %v304
  %v313 = vpack.c.b16 %v307, %v306
  %320 = vmatprep.subr.bf16.mxu0 0
  %321 = vmatpush1.bf16.msra.mxu0 0
  %322 = vmatprep.subr.bf16.mxu0 0
  %323 = vmatpush1.bf16.msra.mxu0 0
  %324 = vmatprep.subr.bf16.mxu0 0
  %325 = vmatpush1.bf16.msra.mxu0 %v313
  %326 = vmatprep.subr.bf16.mxu0 0
  %327 = vmatpush1.bf16.msra.mxu0 %v312
  %328 = vmatprep.subr.bf16.mxu0 0
  %329 = vmatpush1.bf16.msra.mxu0 %v311
  %330 = vmatprep.subr.bf16.mxu0 0
  %331 = vmatpush1.bf16.msra.mxu0 %v310
  %332 = vmatprep.subr.bf16.mxu0 0
  %333 = vmatpush1.bf16.msra.mxu0 %v309
  %334 = vmatprep.subr.bf16.mxu0 0
  %335 = vmatpush1.bf16.msra.mxu0 %v308
  %336 = vmatprep.subr.bf16.mxu0 0
  %337 = vmatpush2.bf16.msra.mxu0 0
  %338 = vmatprep.subr.bf16.mxu0 0
  %339 = vmatpush2.bf16.msra.mxu0 0
  %340 = vmatprep.subr.bf16.mxu0 0
  %341 = vmatpush2.bf16.msra.mxu0 0
  %342 = vmatprep.subr.bf16.mxu0 0
  %343 = vmatpush2.bf16.msra.mxu0 0
  %344 = vmatprep.subr.bf16.mxu0 0
  %345 = vmatpush2.bf16.msra.mxu0 0
  %346 = vmatprep.subr.bf16.mxu0 0
  %347 = vmatpush2.bf16.msra.mxu0 0
  %348 = vmatprep.subr.bf16.mxu0 0
  %349 = vmatpush2.bf16.msra.mxu0 0
  %350 = vmatprep.subr.bf16.mxu0 0
  %351 = vmatpush2.bf16.msra.mxu0 0
  %352 = vmatprep.mubr.bf16.mxu0 0
  %353 = vmatmul.mubr.bf16.gmra.mxu0 %v212
  %v354 = vpop.f32.mrf.mxu0
  %v355 = vadd.f32 0.0, %v354
  %v356 = vpop.f32.mrf.mxu0
  %v357 = vpop.f32.mrf.mxu0
  %v358 = vadd.f32 0.0, %v357
  %v359 = vpop.f32.mrf.mxu0
  %360 = vmatprep.mubr.bf16.mxu0 0
  %361 = vmatmul.mubr.bf16.gmra.mxu0 %v215
  %v362 = vpop.f32.mrf.mxu0
  %v363 = vadd.f32 0.0, %v362
  %v364 = vpop.f32.mrf.mxu0
  %v365 = vpop.f32.mrf.mxu0
  %v366 = vadd.f32 0.0, %v365
  %v367 = vpop.f32.mrf.mxu0
  %368 = vdwg.mxu0
  %vm369 = vcmask 261120
  %v371 = vsel %vm369, %v267, 0
  %v374 = vsel %vm369, %v268, 0
  %v377 = vsel %vm369, %v269, 0
  %v380 = vsel %vm369, %v270, 0
  %382 = vmatprep.subr.mxu0 0.0
  %383 = vmatpush1.msra.mxu0 0.0
  %384 = vmatprep.subr.mxu0 0.0
  %385 = vmatpush1.msra.mxu0 0.0
  %386 = vmatprep.subr.mxu0 0.0
  %387 = vmatpush1.msra.mxu0 0.0
  %388 = vmatprep.subr.mxu0 0.0
  %389 = vmatpush1.msra.mxu0 0.0
  %390 = vmatprep.subr.mxu0 0.0
  %391 = vmatpush1.msra.mxu0 0.0
  %392 = vmatprep.subr.mxu0 0.0
  %393 = vmatpush1.msra.mxu0 0.0
  %394 = vmatprep.subr.mxu0 0.0
  %395 = vmatpush1.msra.mxu0 0.0
  %396 = vmatprep.subr.mxu0 0.0
  %397 = vmatpush1.msra.mxu0 0.0
  %398 = vmatprep.subr.mxu0 0.0
  %399 = vmatpush1.msra.mxu0 0.0
  %400 = vmatprep.subr.mxu0 0.0
  %401 = vmatpush1.msra.mxu0 0.0
  %402 = vmatprep.subr.mxu0 0.0
  %403 = vmatpush1.msra.mxu0 0.0
  %404 = vmatprep.subr.mxu0 0.0
  %405 = vmatpush1.msra.mxu0 0.0
  %406 = vmatprep.subr.mxu0 0.0
  %407 = vmatpush1.msra.mxu0 %v366
  %408 = vmatprep.subr.mxu0 0.0
  %409 = vmatpush1.msra.mxu0 %v363
  %410 = vmatprep.subr.mxu0 0.0
  %411 = vmatpush1.msra.mxu0 %v358
  %412 = vmatprep.subr.mxu0 0.0
  %413 = vmatpush1.msra.mxu0 %v355
  %414 = vmatprep.subr.mxu0 0.0
  %415 = vmatpush2.msra.mxu0 0.0
  %416 = vmatprep.subr.mxu0 0.0
  %417 = vmatpush2.msra.mxu0 0.0
  %418 = vmatprep.subr.mxu0 0.0
  %419 = vmatpush2.msra.mxu0 0.0
  %420 = vmatprep.subr.mxu0 0.0
  %421 = vmatpush2.msra.mxu0 0.0
  %422 = vmatprep.subr.mxu0 0.0
  %423 = vmatpush2.msra.mxu0 0.0
  %424 = vmatprep.subr.mxu0 0.0
  %425 = vmatpush2.msra.mxu0 0.0
  %426 = vmatprep.subr.mxu0 0.0
  %427 = vmatpush2.msra.mxu0 0.0
  %428 = vmatprep.subr.mxu0 0.0
  %429 = vmatpush2.msra.mxu0 0.0
  %430 = vmatprep.subr.mxu0 0.0
  %431 = vmatpush2.msra.mxu0 0.0
  %432 = vmatprep.subr.mxu0 0.0
  %433 = vmatpush2.msra.mxu0 0.0
  %434 = vmatprep.subr.mxu0 0.0
  %435 = vmatpush2.msra.mxu0 0.0
  %436 = vmatprep.subr.mxu0 0.0
  %437 = vmatpush2.msra.mxu0 0.0
  %438 = vmatprep.subr.mxu0 0.0
  %439 = vmatpush2.msra.mxu0 0.0
  %440 = vmatprep.subr.mxu0 0.0
  %441 = vmatpush2.msra.mxu0 0.0
  %442 = vmatprep.subr.mxu0 0.0
  %443 = vmatpush2.msra.mxu0 0.0
  %444 = vmatprep.subr.mxu0 0.0
  %445 = vmatpush2.msra.mxu0 0.0
  %446 = vmatprep.mubr.f32.mxu0 0.0
  %447 = vmatmul.mubr.f32.gmra.mxu0 %v371
  %v448 = vpop.f32.mrf.mxu0
  %v449 = vadd.f32 0.0, %v448
  %v450 = vpop.f32.mrf.mxu0
  %451 = vmatprep.mubr.f32.mxu0 0.0
  %452 = vmatmul.mubr.f32.gmra.mxu0 %v374
  %v453 = vpop.f32.mrf.mxu0
  %v454 = vadd.f32 0.0, %v453
  %v455 = vpop.f32.mrf.mxu0
  %456 = vmatprep.mubr.f32.mxu0 0.0
  %457 = vmatmul.mubr.f32.gmra.mxu0 %v377
  %v458 = vpop.f32.mrf.mxu0
  %v459 = vadd.f32 0.0, %v458
  %v460 = vpop.f32.mrf.mxu0
  %461 = vmatprep.mubr.f32.mxu0 0.0
  %462 = vmatmul.mubr.f32.gmra.mxu0 %v380
  %v463 = vpop.f32.mrf.mxu0
  %v464 = vadd.f32 0.0, %v463
  %v465 = vpop.f32.mrf.mxu0
  %466 = vdwg.mxu0
  %v468 = vsel %vm369, %v158, 0
  %v471 = vsel %vm369, %v159, 0
  %v474 = vsel %vm369, %v160, 0
  %v477 = vsel %vm369, %v161, 0
  %479 = vmatprep.subr.mxu0 0.0
  %480 = vmatpush1.msra.mxu0 0.0
  %481 = vmatprep.subr.mxu0 0.0
  %482 = vmatpush1.msra.mxu0 0.0
  %483 = vmatprep.subr.mxu0 0.0
  %484 = vmatpush1.msra.mxu0 0.0
  %485 = vmatprep.subr.mxu0 0.0
  %486 = vmatpush1.msra.mxu0 0.0
  %487 = vmatprep.subr.mxu0 0.0
  %488 = vmatpush1.msra.mxu0 0.0
  %489 = vmatprep.subr.mxu0 0.0
  %490 = vmatpush1.msra.mxu0 0.0
  %491 = vmatprep.subr.mxu0 0.0
  %492 = vmatpush1.msra.mxu0 0.0
  %493 = vmatprep.subr.mxu0 0.0
  %494 = vmatpush1.msra.mxu0 0.0
  %495 = vmatprep.subr.mxu0 0.0
  %496 = vmatpush1.msra.mxu0 0.0
  %497 = vmatprep.subr.mxu0 0.0
  %498 = vmatpush1.msra.mxu0 0.0
  %499 = vmatprep.subr.mxu0 0.0
  %500 = vmatpush1.msra.mxu0 0.0
  %501 = vmatprep.subr.mxu0 0.0
  %502 = vmatpush1.msra.mxu0 0.0
  %503 = vmatprep.subr.mxu0 0.0
  %504 = vmatpush1.msra.mxu0 %v263
  %505 = vmatprep.subr.mxu0 0.0
  %506 = vmatpush1.msra.mxu0 %v260
  %507 = vmatprep.subr.mxu0 0.0
  %508 = vmatpush1.msra.mxu0 %v255
  %509 = vmatprep.subr.mxu0 0.0
  %510 = vmatpush1.msra.mxu0 %v252
  %511 = vmatprep.subr.mxu0 0.0
  %512 = vmatpush2.msra.mxu0 0.0
  %513 = vmatprep.subr.mxu0 0.0
  %514 = vmatpush2.msra.mxu0 0.0
  %515 = vmatprep.subr.mxu0 0.0
  %516 = vmatpush2.msra.mxu0 0.0
  %517 = vmatprep.subr.mxu0 0.0
  %518 = vmatpush2.msra.mxu0 0.0
  %519 = vmatprep.subr.mxu0 0.0
  %520 = vmatpush2.msra.mxu0 0.0
  %521 = vmatprep.subr.mxu0 0.0
  %522 = vmatpush2.msra.mxu0 0.0
  %523 = vmatprep.subr.mxu0 0.0
  %524 = vmatpush2.msra.mxu0 0.0
  %525 = vmatprep.subr.mxu0 0.0
  %526 = vmatpush2.msra.mxu0 0.0
  %527 = vmatprep.subr.mxu0 0.0
  %528 = vmatpush2.msra.mxu0 0.0
  %529 = vmatprep.subr.mxu0 0.0
  %530 = vmatpush2.msra.mxu0 0.0
  %531 = vmatprep.subr.mxu0 0.0
  %532 = vmatpush2.msra.mxu0 0.0
  %533 = vmatprep.subr.mxu0 0.0
  %534 = vmatpush2.msra.mxu0 0.0
  %535 = vmatprep.subr.mxu0 0.0
  %536 = vmatpush2.msra.mxu0 0.0
  %537 = vmatprep.subr.mxu0 0.0
  %538 = vmatpush2.msra.mxu0 0.0
  %539 = vmatprep.subr.mxu0 0.0
  %540 = vmatpush2.msra.mxu0 0.0
  %541 = vmatprep.subr.mxu0 0.0
  %542 = vmatpush2.msra.mxu0 0.0
  %543 = vmatprep.mubr.f32.mxu0 0.0
  %544 = vmatmul.mubr.f32.gmra.mxu0 %v468
  %v545 = vpop.f32.mrf.mxu0
  %v546 = vadd.f32 %v449, %v545
  %v547 = vpop.f32.mrf.mxu0
  %548 = vmatprep.mubr.f32.mxu0 0.0
  %549 = vmatmul.mubr.f32.gmra.mxu0 %v471
  %v550 = vpop.f32.mrf.mxu0
  %v551 = vadd.f32 %v454, %v550
  %v552 = vpop.f32.mrf.mxu0
  %553 = vmatprep.mubr.f32.mxu0 0.0
  %554 = vmatmul.mubr.f32.gmra.mxu0 %v474
  %v555 = vpop.f32.mrf.mxu0
  %v556 = vadd.f32 %v459, %v555
  %v557 = vpop.f32.mrf.mxu0
  %558 = vmatprep.mubr.f32.mxu0 0.0
  %559 = vmatmul.mubr.f32.gmra.mxu0 %v477
  %v560 = vpop.f32.mrf.mxu0
  %v561 = vadd.f32 %v464, %v560
  %v562 = vpop.f32.mrf.mxu0
  %563 = vdwg.mxu0
  %s564 = scalar_lea.vmem %s3, 64
  %v565 = vld [vmem:[%s564] sm:$0xff]
  %v566 = vld [vmem:[%s564 + $0x8] sm:$0xff]
  %v567 = vld [vmem:[%s564 + $0x10] sm:$0xff]
  %v568 = vld [vmem:[%s564 + $0x18] sm:$0xff]
  %s569 = scalar_lea.vmem %s4, 96
  %v570 = vld [vmem:[%s569] sm:$0xf]
  %v571 = vld [vmem:[%s569 + $0x4] sm:$0xf]
  %v572 = vld [vmem:[%s569 + $0x8] sm:$0xf]
  %v573 = vld [vmem:[%s569 + $0xc] sm:$0xf]
  %v574 = vld [vmem:[%s569 + $0x10] sm:$0xf]
  %v575 = vld [vmem:[%s569 + $0x14] sm:$0xf]
  %v576 = vld [vmem:[%s569 + $0x18] sm:$0xf]
  %v577 = vld [vmem:[%s569 + $0x1c] sm:$0xf]
  %v578 = vld [vmem:[%s569 + $0x20] sm:$0xf]
  %v579 = vld [vmem:[%s569 + $0x24] sm:$0xf]
  %v580 = vld [vmem:[%s569 + $0x28] sm:$0xf]
  %v581 = vld [vmem:[%s569 + $0x2c] sm:$0xf]
  %v594 = vunpack.c.l.b16 %v570
  %v595 = vunpack.c.l.b16 %v571
  %v596 = vunpack.c.l.b16 %v572
  %v597 = vunpack.c.l.b16 %v573
  %v598 = vunpack.c.l.b16 %v574
  %v599 = vunpack.c.l.b16 %v575
  %v600 = vunpack.c.l.b16 %v576
  %v601 = vunpack.c.l.b16 %v577
  %v602 = vunpack.c.l.b16 %v578
  %v603 = vunpack.c.l.b16 %v579
  %v604 = vunpack.c.l.b16 %v580
  %v605 = vunpack.c.l.b16 %v581
  %v606 = vpack.c.b16 %v595, %v594
  %v607 = vpack.c.b16 %v597, %v596
  %v608 = vpack.c.b16 %v599, %v598
  %v609 = vpack.c.b16 %v601, %v600
  %v610 = vpack.c.b16 %v603, %v602
  %v611 = vpack.c.b16 %v605, %v604
  %618 = vmatprep.subr.bf16.mxu0 0
  %619 = vmatpush1.bf16.msra.mxu0 0
  %620 = vmatprep.subr.bf16.mxu0 0
  %621 = vmatpush1.bf16.msra.mxu0 0
  %622 = vmatprep.subr.bf16.mxu0 0
  %623 = vmatpush1.bf16.msra.mxu0 %v611
  %624 = vmatprep.subr.bf16.mxu0 0
  %625 = vmatpush1.bf16.msra.mxu0 %v610
  %626 = vmatprep.subr.bf16.mxu0 0
  %627 = vmatpush1.bf16.msra.mxu0 %v609
  %628 = vmatprep.subr.bf16.mxu0 0
  %629 = vmatpush1.bf16.msra.mxu0 %v608
  %630 = vmatprep.subr.bf16.mxu0 0
  %631 = vmatpush1.bf16.msra.mxu0 %v607
  %632 = vmatprep.subr.bf16.mxu0 0
  %633 = vmatpush1.bf16.msra.mxu0 %v606
  %634 = vmatprep.subr.bf16.mxu0 0
  %635 = vmatpush2.bf16.msra.mxu0 0
  %636 = vmatprep.subr.bf16.mxu0 0
  %637 = vmatpush2.bf16.msra.mxu0 0
  %638 = vmatprep.subr.bf16.mxu0 0
  %639 = vmatpush2.bf16.msra.mxu0 0
  %640 = vmatprep.subr.bf16.mxu0 0
  %641 = vmatpush2.bf16.msra.mxu0 0
  %642 = vmatprep.subr.bf16.mxu0 0
  %643 = vmatpush2.bf16.msra.mxu0 0
  %644 = vmatprep.subr.bf16.mxu0 0
  %645 = vmatpush2.bf16.msra.mxu0 0
  %646 = vmatprep.subr.bf16.mxu0 0
  %647 = vmatpush2.bf16.msra.mxu0 0
  %648 = vmatprep.subr.bf16.mxu0 0
  %649 = vmatpush2.bf16.msra.mxu0 0
  %650 = vmatprep.mubr.bf16.mxu0 0
  %651 = vmatmul.mubr.bf16.gmra.mxu0 %v212
  %v652 = vpop.f32.mrf.mxu0
  %v653 = vadd.f32 0.0, %v652
  %v654 = vpop.f32.mrf.mxu0
  %v655 = vpop.f32.mrf.mxu0
  %v656 = vadd.f32 0.0, %v655
  %v657 = vpop.f32.mrf.mxu0
  %658 = vmatprep.mubr.bf16.mxu0 0
  %659 = vmatmul.mubr.bf16.gmra.mxu0 %v215
  %v660 = vpop.f32.mrf.mxu0
  %v661 = vadd.f32 0.0, %v660
  %v662 = vpop.f32.mrf.mxu0
  %v663 = vpop.f32.mrf.mxu0
  %v664 = vadd.f32 0.0, %v663
  %v665 = vpop.f32.mrf.mxu0
  %666 = vdwg.mxu0
  %v668 = vsel %vm369, %v565, 0
  %v671 = vsel %vm369, %v566, 0
  %v674 = vsel %vm369, %v567, 0
  %v677 = vsel %vm369, %v568, 0
  %679 = vmatprep.subr.mxu0 0.0
  %680 = vmatpush1.msra.mxu0 0.0
  %681 = vmatprep.subr.mxu0 0.0
  %682 = vmatpush1.msra.mxu0 0.0
  %683 = vmatprep.subr.mxu0 0.0
  %684 = vmatpush1.msra.mxu0 0.0
  %685 = vmatprep.subr.mxu0 0.0
  %686 = vmatpush1.msra.mxu0 0.0
  %687 = vmatprep.subr.mxu0 0.0
  %688 = vmatpush1.msra.mxu0 0.0
  %689 = vmatprep.subr.mxu0 0.0
  %690 = vmatpush1.msra.mxu0 0.0
  %691 = vmatprep.subr.mxu0 0.0
  %692 = vmatpush1.msra.mxu0 0.0
  %693 = vmatprep.subr.mxu0 0.0
  %694 = vmatpush1.msra.mxu0 0.0
  %695 = vmatprep.subr.mxu0 0.0
  %696 = vmatpush1.msra.mxu0 0.0
  %697 = vmatprep.subr.mxu0 0.0
  %698 = vmatpush1.msra.mxu0 0.0
  %699 = vmatprep.subr.mxu0 0.0
  %700 = vmatpush1.msra.mxu0 0.0
  %701 = vmatprep.subr.mxu0 0.0
  %702 = vmatpush1.msra.mxu0 0.0
  %703 = vmatprep.subr.mxu0 0.0
  %704 = vmatpush1.msra.mxu0 %v664
  %705 = vmatprep.subr.mxu0 0.0
  %706 = vmatpush1.msra.mxu0 %v661
  %707 = vmatprep.subr.mxu0 0.0
  %708 = vmatpush1.msra.mxu0 %v656
  %709 = vmatprep.subr.mxu0 0.0
  %710 = vmatpush1.msra.mxu0 %v653
  %711 = vmatprep.subr.mxu0 0.0
  %712 = vmatpush2.msra.mxu0 0.0
  %713 = vmatprep.subr.mxu0 0.0
  %714 = vmatpush2.msra.mxu0 0.0
  %715 = vmatprep.subr.mxu0 0.0
  %716 = vmatpush2.msra.mxu0 0.0
  %717 = vmatprep.subr.mxu0 0.0
  %718 = vmatpush2.msra.mxu0 0.0
  %719 = vmatprep.subr.mxu0 0.0
  %720 = vmatpush2.msra.mxu0 0.0
  %721 = vmatprep.subr.mxu0 0.0
  %722 = vmatpush2.msra.mxu0 0.0
  %723 = vmatprep.subr.mxu0 0.0
  %724 = vmatpush2.msra.mxu0 0.0
  %725 = vmatprep.subr.mxu0 0.0
  %726 = vmatpush2.msra.mxu0 0.0
  %727 = vmatprep.subr.mxu0 0.0
  %728 = vmatpush2.msra.mxu0 0.0
  %729 = vmatprep.subr.mxu0 0.0
  %730 = vmatpush2.msra.mxu0 0.0
  %731 = vmatprep.subr.mxu0 0.0
  %732 = vmatpush2.msra.mxu0 0.0
  %733 = vmatprep.subr.mxu0 0.0
  %734 = vmatpush2.msra.mxu0 0.0
  %735 = vmatprep.subr.mxu0 0.0
  %736 = vmatpush2.msra.mxu0 0.0
  %737 = vmatprep.subr.mxu0 0.0
  %738 = vmatpush2.msra.mxu0 0.0
  %739 = vmatprep.subr.mxu0 0.0
  %740 = vmatpush2.msra.mxu0 0.0
  %741 = vmatprep.subr.mxu0 0.0
  %742 = vmatpush2.msra.mxu0 0.0
  %743 = vmatprep.mubr.f32.mxu0 0.0
  %744 = vmatmul.mubr.f32.gmra.mxu0 %v668
  %v745 = vpop.f32.mrf.mxu0
  %v746 = vadd.f32 0.0, %v745
  %v747 = vpop.f32.mrf.mxu0
  %748 = vmatprep.mubr.f32.mxu0 0.0
  %749 = vmatmul.mubr.f32.gmra.mxu0 %v671
  %v750 = vpop.f32.mrf.mxu0
  %v751 = vadd.f32 0.0, %v750
  %v752 = vpop.f32.mrf.mxu0
  %753 = vmatprep.mubr.f32.mxu0 0.0
  %754 = vmatmul.mubr.f32.gmra.mxu0 %v674
  %v755 = vpop.f32.mrf.mxu0
  %v756 = vadd.f32 0.0, %v755
  %v757 = vpop.f32.mrf.mxu0
  %758 = vmatprep.mubr.f32.mxu0 0.0
  %759 = vmatmul.mubr.f32.gmra.mxu0 %v677
  %v760 = vpop.f32.mrf.mxu0
  %v761 = vadd.f32 0.0, %v760
  %v762 = vpop.f32.mrf.mxu0
  %763 = vdwg.mxu0
  %v764 = vadd.f32 %v546, %v746
  %v765 = vadd.f32 %v551, %v751
  %v766 = vadd.f32 %v556, %v756
  %v767 = vadd.f32 %v561, %v761
  %v768 = vld [vmem:[%s6] sm:$0x1]
  %v769 = vlaneseq
  %v770 = vshrl.u32 %v769, 7
  %v771 = vsub.s32 0, %v770
  %v772 = vrot.slane %v768, %v771
  %v773 = vadd.f32 %v764, %v772
  %v774 = vadd.f32 %v765, %v772
  %v775 = vadd.f32 %v766, %v772
  %v776 = vadd.f32 %v767, %v772
  %v777 = vmax.f32 %v773, 0.0
  %v778 = vmax.f32 %v774, 0.0
  %v779 = vmax.f32 %v775, 0.0
  %v780 = vmax.f32 %v776, 0.0
  %v781 = vpack.c.bf16 %v778, %v777
  %v782 = vpack.c.bf16 %v780, %v779
  %v783 = vld [vmem:[%s5] sm:$0xf]
  %v784 = vld [vmem:[%s5 + $0x4] sm:$0xf]
  %v785 = vld [vmem:[%s5 + $0x8] sm:$0xf]
  %v786 = vld [vmem:[%s5 + $0xc] sm:$0xf]
  %v787 = vld [vmem:[%s5 + $0x10] sm:$0xf]
  %v788 = vld [vmem:[%s5 + $0x14] sm:$0xf]
  %v789 = vld [vmem:[%s5 + $0x18] sm:$0xf]
  %v790 = vld [vmem:[%s5 + $0x1c] sm:$0xf]
  %v799 = vunpack.c.l.b16 %v783
  %v800 = vunpack.c.l.b16 %v784
  %v801 = vunpack.c.l.b16 %v785
  %v802 = vunpack.c.l.b16 %v786
  %v803 = vunpack.c.l.b16 %v787
  %v804 = vunpack.c.l.b16 %v788
  %v805 = vunpack.c.l.b16 %v789
  %v806 = vunpack.c.l.b16 %v790
  %v807 = vpack.c.b16 %v800, %v799
  %v808 = vpack.c.b16 %v802, %v801
  %v809 = vpack.c.b16 %v804, %v803
  %v810 = vpack.c.b16 %v806, %v805
  %v816 = vsel %vm151, %v781, 0
  %v819 = vsel %vm151, %v782, 0
  %821 = vmatprep.subr.bf16.mxu0 0
  %822 = vmatpush1.bf16.msra.mxu0 0
  %823 = vmatprep.subr.bf16.mxu0 0
  %824 = vmatpush1.bf16.msra.mxu0 0
  %825 = vmatprep.subr.bf16.mxu0 0
  %826 = vmatpush1.bf16.msra.mxu0 0
  %827 = vmatprep.subr.bf16.mxu0 0
  %828 = vmatpush1.bf16.msra.mxu0 0
  %829 = vmatprep.subr.bf16.mxu0 0
  %830 = vmatpush1.bf16.msra.mxu0 %v810
  %831 = vmatprep.subr.bf16.mxu0 0
  %832 = vmatpush1.bf16.msra.mxu0 %v809
  %833 = vmatprep.subr.bf16.mxu0 0
  %834 = vmatpush1.bf16.msra.mxu0 %v808
  %835 = vmatprep.subr.bf16.mxu0 0
  %836 = vmatpush1.bf16.msra.mxu0 %v807
  %837 = vmatprep.subr.bf16.mxu0 0
  %838 = vmatpush2.bf16.msra.mxu0 0
  %839 = vmatprep.subr.bf16.mxu0 0
  %840 = vmatpush2.bf16.msra.mxu0 0
  %841 = vmatprep.subr.bf16.mxu0 0
  %842 = vmatpush2.bf16.msra.mxu0 0
  %843 = vmatprep.subr.bf16.mxu0 0
  %844 = vmatpush2.bf16.msra.mxu0 0
  %845 = vmatprep.subr.bf16.mxu0 0
  %846 = vmatpush2.bf16.msra.mxu0 0
  %847 = vmatprep.subr.bf16.mxu0 0
  %848 = vmatpush2.bf16.msra.mxu0 0
  %849 = vmatprep.subr.bf16.mxu0 0
  %850 = vmatpush2.bf16.msra.mxu0 0
  %851 = vmatprep.subr.bf16.mxu0 0
  %852 = vmatpush2.bf16.msra.mxu0 0
  %853 = vmatprep.mubr.bf16.mxu0 0
  %854 = vmatmul.mubr.bf16.gmra.mxu0 %v816
  %v855 = vpop.f32.mrf.mxu0
  %v856 = vadd.f32 0.0, %v855
  %v857 = vpop.f32.mrf.mxu0
  %v858 = vpop.f32.mrf.mxu0
  %v859 = vadd.f32 0.0, %v858
  %v860 = vpop.f32.mrf.mxu0
  %861 = vmatprep.mubr.bf16.mxu0 0
  %862 = vmatmul.mubr.bf16.gmra.mxu0 %v819
  %v863 = vpop.f32.mrf.mxu0
  %v864 = vadd.f32 0.0, %v863
  %v865 = vpop.f32.mrf.mxu0
  %v866 = vpop.f32.mrf.mxu0
  %v867 = vadd.f32 0.0, %v866
  %v868 = vpop.f32.mrf.mxu0
  %869 = vdwg.mxu0
  %s870 = scalar_lea.vmem %s5, 32
  %v871 = vld [vmem:[%s870] sm:$0xf]
  %v872 = vld [vmem:[%s870 + $0x4] sm:$0xf]
  %v873 = vld [vmem:[%s870 + $0x8] sm:$0xf]
  %v874 = vld [vmem:[%s870 + $0xc] sm:$0xf]
  %v875 = vld [vmem:[%s870 + $0x10] sm:$0xf]
  %v876 = vld [vmem:[%s870 + $0x14] sm:$0xf]
  %v877 = vld [vmem:[%s870 + $0x18] sm:$0xf]
  %v878 = vld [vmem:[%s870 + $0x1c] sm:$0xf]
  %v887 = vunpack.c.l.b16 %v871
  %v888 = vunpack.c.l.b16 %v872
  %v889 = vunpack.c.l.b16 %v873
  %v890 = vunpack.c.l.b16 %v874
  %v891 = vunpack.c.l.b16 %v875
  %v892 = vunpack.c.l.b16 %v876
  %v893 = vunpack.c.l.b16 %v877
  %v894 = vunpack.c.l.b16 %v878
  %v895 = vpack.c.b16 %v888, %v887
  %v896 = vpack.c.b16 %v890, %v889
  %v897 = vpack.c.b16 %v892, %v891
  %v898 = vpack.c.b16 %v894, %v893
  %903 = vmatprep.subr.bf16.mxu0 0
  %904 = vmatpush1.bf16.msra.mxu0 0
  %905 = vmatprep.subr.bf16.mxu0 0
  %906 = vmatpush1.bf16.msra.mxu0 0
  %907 = vmatprep.subr.bf16.mxu0 0
  %908 = vmatpush1.bf16.msra.mxu0 0
  %909 = vmatprep.subr.bf16.mxu0 0
  %910 = vmatpush1.bf16.msra.mxu0 0
  %911 = vmatprep.subr.bf16.mxu0 0
  %912 = vmatpush1.bf16.msra.mxu0 %v898
  %913 = vmatprep.subr.bf16.mxu0 0
  %914 = vmatpush1.bf16.msra.mxu0 %v897
  %915 = vmatprep.subr.bf16.mxu0 0
  %916 = vmatpush1.bf16.msra.mxu0 %v896
  %917 = vmatprep.subr.bf16.mxu0 0
  %918 = vmatpush1.bf16.msra.mxu0 %v895
  %919 = vmatprep.subr.bf16.mxu0 0
  %920 = vmatpush2.bf16.msra.mxu0 0
  %921 = vmatprep.subr.bf16.mxu0 0
  %922 = vmatpush2.bf16.msra.mxu0 0
  %923 = vmatprep.subr.bf16.mxu0 0
  %924 = vmatpush2.bf16.msra.mxu0 0
  %925 = vmatprep.subr.bf16.mxu0 0
  %926 = vmatpush2.bf16.msra.mxu0 0
  %927 = vmatprep.subr.bf16.mxu0 0
  %928 = vmatpush2.bf16.msra.mxu0 0
  %929 = vmatprep.subr.bf16.mxu0 0
  %930 = vmatpush2.bf16.msra.mxu0 0
  %931 = vmatprep.subr.bf16.mxu0 0
  %932 = vmatpush2.bf16.msra.mxu0 0
  %933 = vmatprep.subr.bf16.mxu0 0
  %934 = vmatpush2.bf16.msra.mxu0 0
  %935 = vmatprep.mubr.bf16.mxu0 0
  %936 = vmatmul.mubr.bf16.gmra.mxu0 %v816
  %v937 = vpop.f32.mrf.mxu0
  %v938 = vadd.f32 0.0, %v937
  %v939 = vpop.f32.mrf.mxu0
  %v940 = vpop.f32.mrf.mxu0
  %v941 = vadd.f32 0.0, %v940
  %v942 = vpop.f32.mrf.mxu0
  %943 = vmatprep.mubr.bf16.mxu0 0
  %944 = vmatmul.mubr.bf16.gmra.mxu0 %v819
  %v945 = vpop.f32.mrf.mxu0
  %v946 = vadd.f32 0.0, %v945
  %v947 = vpop.f32.mrf.mxu0
  %v948 = vpop.f32.mrf.mxu0
  %v949 = vadd.f32 0.0, %v948
  %v950 = vpop.f32.mrf.mxu0
  %951 = vdwg.mxu0
  %952 = vmatprep.subr.mxu0 0.0
  %953 = vmatpush1.msra.mxu0 0.0
  %954 = vmatprep.subr.mxu0 0.0
  %955 = vmatpush1.msra.mxu0 0.0
  %956 = vmatprep.subr.mxu0 0.0
  %957 = vmatpush1.msra.mxu0 0.0
  %958 = vmatprep.subr.mxu0 0.0
  %959 = vmatpush1.msra.mxu0 0.0
  %960 = vmatprep.subr.mxu0 0.0
  %961 = vmatpush1.msra.mxu0 0.0
  %962 = vmatprep.subr.mxu0 0.0
  %963 = vmatpush1.msra.mxu0 0.0
  %964 = vmatprep.subr.mxu0 0.0
  %965 = vmatpush1.msra.mxu0 0.0
  %966 = vmatprep.subr.mxu0 0.0
  %967 = vmatpush1.msra.mxu0 0.0
  %968 = vmatprep.subr.mxu0 0.0
  %969 = vmatpush1.msra.mxu0 0.0
  %970 = vmatprep.subr.mxu0 0.0
  %971 = vmatpush1.msra.mxu0 0.0
  %972 = vmatprep.subr.mxu0 0.0
  %973 = vmatpush1.msra.mxu0 0.0
  %974 = vmatprep.subr.mxu0 0.0
  %975 = vmatpush1.msra.mxu0 0.0
  %976 = vmatprep.subr.mxu0 0.0
  %977 = vmatpush1.msra.mxu0 %v949
  %978 = vmatprep.subr.mxu0 0.0
  %979 = vmatpush1.msra.mxu0 %v946
  %980 = vmatprep.subr.mxu0 0.0
  %981 = vmatpush1.msra.mxu0 %v941
  %982 = vmatprep.subr.mxu0 0.0
  %983 = vmatpush1.msra.mxu0 %v938
  %984 = vmatprep.subr.mxu0 0.0
  %985 = vmatpush2.msra.mxu0 0.0
  %986 = vmatprep.subr.mxu0 0.0
  %987 = vmatpush2.msra.mxu0 0.0
  %988 = vmatprep.subr.mxu0 0.0
  %989 = vmatpush2.msra.mxu0 0.0
  %990 = vmatprep.subr.mxu0 0.0
  %991 = vmatpush2.msra.mxu0 0.0
  %992 = vmatprep.subr.mxu0 0.0
  %993 = vmatpush2.msra.mxu0 0.0
  %994 = vmatprep.subr.mxu0 0.0
  %995 = vmatpush2.msra.mxu0 0.0
  %996 = vmatprep.subr.mxu0 0.0
  %997 = vmatpush2.msra.mxu0 0.0
  %998 = vmatprep.subr.mxu0 0.0
  %999 = vmatpush2.msra.mxu0 0.0
  %1000 = vmatprep.subr.mxu0 0.0
  %1001 = vmatpush2.msra.mxu0 0.0
  %1002 = vmatprep.subr.mxu0 0.0
  %1003 = vmatpush2.msra.mxu0 0.0
  %1004 = vmatprep.subr.mxu0 0.0
  %1005 = vmatpush2.msra.mxu0 0.0
  %1006 = vmatprep.subr.mxu0 0.0
  %1007 = vmatpush2.msra.mxu0 0.0
  %1008 = vmatprep.subr.mxu0 0.0
  %1009 = vmatpush2.msra.mxu0 0.0
  %1010 = vmatprep.subr.mxu0 0.0
  %1011 = vmatpush2.msra.mxu0 0.0
  %1012 = vmatprep.subr.mxu0 0.0
  %1013 = vmatpush2.msra.mxu0 0.0
  %1014 = vmatprep.subr.mxu0 0.0
  %1015 = vmatpush2.msra.mxu0 0.0
  %1016 = vmatprep.mubr.f32.mxu0 0.0
  %1017 = vmatmul.mubr.f32.gmra.mxu0 %v371
  %v1018 = vpop.f32.mrf.mxu0
  %v1019 = vadd.f32 0.0, %v1018
  %v1020 = vpop.f32.mrf.mxu0
  %1021 = vmatprep.mubr.f32.mxu0 0.0
  %1022 = vmatmul.mubr.f32.gmra.mxu0 %v374
  %v1023 = vpop.f32.mrf.mxu0
  %v1024 = vadd.f32 0.0, %v1023
  %v1025 = vpop.f32.mrf.mxu0
  %1026 = vmatprep.mubr.f32.mxu0 0.0
  %1027 = vmatmul.mubr.f32.gmra.mxu0 %v377
  %v1028 = vpop.f32.mrf.mxu0
  %v1029 = vadd.f32 0.0, %v1028
  %v1030 = vpop.f32.mrf.mxu0
  %1031 = vmatprep.mubr.f32.mxu0 0.0
  %1032 = vmatmul.mubr.f32.gmra.mxu0 %v380
  %v1033 = vpop.f32.mrf.mxu0
  %v1034 = vadd.f32 0.0, %v1033
  %v1035 = vpop.f32.mrf.mxu0
  %1036 = vdwg.mxu0
  %1037 = vmatprep.subr.mxu0 0.0
  %1038 = vmatpush1.msra.mxu0 0.0
  %1039 = vmatprep.subr.mxu0 0.0
  %1040 = vmatpush1.msra.mxu0 0.0
  %1041 = vmatprep.subr.mxu0 0.0
  %1042 = vmatpush1.msra.mxu0 0.0
  %1043 = vmatprep.subr.mxu0 0.0
  %1044 = vmatpush1.msra.mxu0 0.0
  %1045 = vmatprep.subr.mxu0 0.0
  %1046 = vmatpush1.msra.mxu0 0.0
  %1047 = vmatprep.subr.mxu0 0.0
  %1048 = vmatpush1.msra.mxu0 0.0
  %1049 = vmatprep.subr.mxu0 0.0
  %1050 = vmatpush1.msra.mxu0 0.0
  %1051 = vmatprep.subr.mxu0 0.0
  %1052 = vmatpush1.msra.mxu0 0.0
  %1053 = vmatprep.subr.mxu0 0.0
  %1054 = vmatpush1.msra.mxu0 0.0
  %1055 = vmatprep.subr.mxu0 0.0
  %1056 = vmatpush1.msra.mxu0 0.0
  %1057 = vmatprep.subr.mxu0 0.0
  %1058 = vmatpush1.msra.mxu0 0.0
  %1059 = vmatprep.subr.mxu0 0.0
  %1060 = vmatpush1.msra.mxu0 0.0
  %1061 = vmatprep.subr.mxu0 0.0
  %1062 = vmatpush1.msra.mxu0 %v867
  %1063 = vmatprep.subr.mxu0 0.0
  %1064 = vmatpush1.msra.mxu0 %v864
  %1065 = vmatprep.subr.mxu0 0.0
  %1066 = vmatpush1.msra.mxu0 %v859
  %1067 = vmatprep.subr.mxu0 0.0
  %1068 = vmatpush1.msra.mxu0 %v856
  %1069 = vmatprep.subr.mxu0 0.0
  %1070 = vmatpush2.msra.mxu0 0.0
  %1071 = vmatprep.subr.mxu0 0.0
  %1072 = vmatpush2.msra.mxu0 0.0
  %1073 = vmatprep.subr.mxu0 0.0
  %1074 = vmatpush2.msra.mxu0 0.0
  %1075 = vmatprep.subr.mxu0 0.0
  %1076 = vmatpush2.msra.mxu0 0.0
  %1077 = vmatprep.subr.mxu0 0.0
  %1078 = vmatpush2.msra.mxu0 0.0
  %1079 = vmatprep.subr.mxu0 0.0
  %1080 = vmatpush2.msra.mxu0 0.0
  %1081 = vmatprep.subr.mxu0 0.0
  %1082 = vmatpush2.msra.mxu0 0.0
  %1083 = vmatprep.subr.mxu0 0.0
  %1084 = vmatpush2.msra.mxu0 0.0
  %1085 = vmatprep.subr.mxu0 0.0
  %1086 = vmatpush2.msra.mxu0 0.0
  %1087 = vmatprep.subr.mxu0 0.0
  %1088 = vmatpush2.msra.mxu0 0.0
  %1089 = vmatprep.subr.mxu0 0.0
  %1090 = vmatpush2.msra.mxu0 0.0
  %1091 = vmatprep.subr.mxu0 0.0
  %1092 = vmatpush2.msra.mxu0 0.0
  %1093 = vmatprep.subr.mxu0 0.0
  %1094 = vmatpush2.msra.mxu0 0.0
  %1095 = vmatprep.subr.mxu0 0.0
  %1096 = vmatpush2.msra.mxu0 0.0
  %1097 = vmatprep.subr.mxu0 0.0
  %1098 = vmatpush2.msra.mxu0 0.0
  %1099 = vmatprep.subr.mxu0 0.0
  %1100 = vmatpush2.msra.mxu0 0.0
  %1101 = vmatprep.mubr.f32.mxu0 0.0
  %1102 = vmatmul.mubr.f32.gmra.mxu0 %v468
  %v1103 = vpop.f32.mrf.mxu0
  %v1104 = vadd.f32 %v1019, %v1103
  %v1105 = vpop.f32.mrf.mxu0
  %1106 = vmatprep.mubr.f32.mxu0 0.0
  %1107 = vmatmul.mubr.f32.gmra.mxu0 %v471
  %v1108 = vpop.f32.mrf.mxu0
  %v1109 = vadd.f32 %v1024, %v1108
  %v1110 = vpop.f32.mrf.mxu0
  %1111 = vmatprep.mubr.f32.mxu0 0.0
  %1112 = vmatmul.mubr.f32.gmra.mxu0 %v474
  %v1113 = vpop.f32.mrf.mxu0
  %v1114 = vadd.f32 %v1029, %v1113
  %v1115 = vpop.f32.mrf.mxu0
  %1116 = vmatprep.mubr.f32.mxu0 0.0
  %1117 = vmatmul.mubr.f32.gmra.mxu0 %v477
  %v1118 = vpop.f32.mrf.mxu0
  %v1119 = vadd.f32 %v1034, %v1118
  %v1120 = vpop.f32.mrf.mxu0
  %1121 = vdwg.mxu0
  %s1122 = scalar_lea.vmem %s5, 64
  %v1123 = vld [vmem:[%s1122] sm:$0xf]
  %v1124 = vld [vmem:[%s1122 + $0x4] sm:$0xf]
  %v1125 = vld [vmem:[%s1122 + $0x8] sm:$0xf]
  %v1126 = vld [vmem:[%s1122 + $0xc] sm:$0xf]
  %v1127 = vld [vmem:[%s1122 + $0x10] sm:$0xf]
  %v1128 = vld [vmem:[%s1122 + $0x14] sm:$0xf]
  %v1129 = vld [vmem:[%s1122 + $0x18] sm:$0xf]
  %v1130 = vld [vmem:[%s1122 + $0x1c] sm:$0xf]
  %v1139 = vunpack.c.l.b16 %v1123
  %v1140 = vunpack.c.l.b16 %v1124
  %v1141 = vunpack.c.l.b16 %v1125
  %v1142 = vunpack.c.l.b16 %v1126
  %v1143 = vunpack.c.l.b16 %v1127
  %v1144 = vunpack.c.l.b16 %v1128
  %v1145 = vunpack.c.l.b16 %v1129
  %v1146 = vunpack.c.l.b16 %v1130
  %v1147 = vpack.c.b16 %v1140, %v1139
  %v1148 = vpack.c.b16 %v1142, %v1141
  %v1149 = vpack.c.b16 %v1144, %v1143
  %v1150 = vpack.c.b16 %v1146, %v1145
  %1155 = vmatprep.subr.bf16.mxu0 0
  %1156 = vmatpush1.bf16.msra.mxu0 0
  %1157 = vmatprep.subr.bf16.mxu0 0
  %1158 = vmatpush1.bf16.msra.mxu0 0
  %1159 = vmatprep.subr.bf16.mxu0 0
  %1160 = vmatpush1.bf16.msra.mxu0 0
  %1161 = vmatprep.subr.bf16.mxu0 0
  %1162 = vmatpush1.bf16.msra.mxu0 0
  %1163 = vmatprep.subr.bf16.mxu0 0
  %1164 = vmatpush1.bf16.msra.mxu0 %v1150
  %1165 = vmatprep.subr.bf16.mxu0 0
  %1166 = vmatpush1.bf16.msra.mxu0 %v1149
  %1167 = vmatprep.subr.bf16.mxu0 0
  %1168 = vmatpush1.bf16.msra.mxu0 %v1148
  %1169 = vmatprep.subr.bf16.mxu0 0
  %1170 = vmatpush1.bf16.msra.mxu0 %v1147
  %1171 = vmatprep.subr.bf16.mxu0 0
  %1172 = vmatpush2.bf16.msra.mxu0 0
  %1173 = vmatprep.subr.bf16.mxu0 0
  %1174 = vmatpush2.bf16.msra.mxu0 0
  %1175 = vmatprep.subr.bf16.mxu0 0
  %1176 = vmatpush2.bf16.msra.mxu0 0
  %1177 = vmatprep.subr.bf16.mxu0 0
  %1178 = vmatpush2.bf16.msra.mxu0 0
  %1179 = vmatprep.subr.bf16.mxu0 0
  %1180 = vmatpush2.bf16.msra.mxu0 0
  %1181 = vmatprep.subr.bf16.mxu0 0
  %1182 = vmatpush2.bf16.msra.mxu0 0
  %1183 = vmatprep.subr.bf16.mxu0 0
  %1184 = vmatpush2.bf16.msra.mxu0 0
  %1185 = vmatprep.subr.bf16.mxu0 0
  %1186 = vmatpush2.bf16.msra.mxu0 0
  %1187 = vmatprep.mubr.bf16.mxu0 0
  %1188 = vmatmul.mubr.bf16.gmra.mxu0 %v816
  %v1189 = vpop.f32.mrf.mxu0
  %v1190 = vadd.f32 0.0, %v1189
  %v1191 = vpop.f32.mrf.mxu0
  %v1192 = vpop.f32.mrf.mxu0
  %v1193 = vadd.f32 0.0, %v1192
  %v1194 = vpop.f32.mrf.mxu0
  %1195 = vmatprep.mubr.bf16.mxu0 0
  %1196 = vmatmul.mubr.bf16.gmra.mxu0 %v819
  %v1197 = vpop.f32.mrf.mxu0
  %v1198 = vadd.f32 0.0, %v1197
  %v1199 = vpop.f32.mrf.mxu0
  %v1200 = vpop.f32.mrf.mxu0
  %v1201 = vadd.f32 0.0, %v1200
  %v1202 = vpop.f32.mrf.mxu0
  %1203 = vdwg.mxu0
  %1204 = vmatprep.subr.mxu0 0.0
  %1205 = vmatpush1.msra.mxu0 0.0
  %1206 = vmatprep.subr.mxu0 0.0
  %1207 = vmatpush1.msra.mxu0 0.0
  %1208 = vmatprep.subr.mxu0 0.0
  %1209 = vmatpush1.msra.mxu0 0.0
  %1210 = vmatprep.subr.mxu0 0.0
  %1211 = vmatpush1.msra.mxu0 0.0
  %1212 = vmatprep.subr.mxu0 0.0
  %1213 = vmatpush1.msra.mxu0 0.0
  %1214 = vmatprep.subr.mxu0 0.0
  %1215 = vmatpush1.msra.mxu0 0.0
  %1216 = vmatprep.subr.mxu0 0.0
  %1217 = vmatpush1.msra.mxu0 0.0
  %1218 = vmatprep.subr.mxu0 0.0
  %1219 = vmatpush1.msra.mxu0 0.0
  %1220 = vmatprep.subr.mxu0 0.0
  %1221 = vmatpush1.msra.mxu0 0.0
  %1222 = vmatprep.subr.mxu0 0.0
  %1223 = vmatpush1.msra.mxu0 0.0
  %1224 = vmatprep.subr.mxu0 0.0
  %1225 = vmatpush1.msra.mxu0 0.0
  %1226 = vmatprep.subr.mxu0 0.0
  %1227 = vmatpush1.msra.mxu0 0.0
  %1228 = vmatprep.subr.mxu0 0.0
  %1229 = vmatpush1.msra.mxu0 %v1201
  %1230 = vmatprep.subr.mxu0 0.0
  %1231 = vmatpush1.msra.mxu0 %v1198
  %1232 = vmatprep.subr.mxu0 0.0
  %1233 = vmatpush1.msra.mxu0 %v1193
  %1234 = vmatprep.subr.mxu0 0.0
  %1235 = vmatpush1.msra.mxu0 %v1190
  %1236 = vmatprep.subr.mxu0 0.0
  %1237 = vmatpush2.msra.mxu0 0.0
  %1238 = vmatprep.subr.mxu0 0.0
  %1239 = vmatpush2.msra.mxu0 0.0
  %1240 = vmatprep.subr.mxu0 0.0
  %1241 = vmatpush2.msra.mxu0 0.0
  %1242 = vmatprep.subr.mxu0 0.0
  %1243 = vmatpush2.msra.mxu0 0.0
  %1244 = vmatprep.subr.mxu0 0.0
  %1245 = vmatpush2.msra.mxu0 0.0
  %1246 = vmatprep.subr.mxu0 0.0
  %1247 = vmatpush2.msra.mxu0 0.0
  %1248 = vmatprep.subr.mxu0 0.0
  %1249 = vmatpush2.msra.mxu0 0.0
  %1250 = vmatprep.subr.mxu0 0.0
  %1251 = vmatpush2.msra.mxu0 0.0
  %1252 = vmatprep.subr.mxu0 0.0
  %1253 = vmatpush2.msra.mxu0 0.0
  %1254 = vmatprep.subr.mxu0 0.0
  %1255 = vmatpush2.msra.mxu0 0.0
  %1256 = vmatprep.subr.mxu0 0.0
  %1257 = vmatpush2.msra.mxu0 0.0
  %1258 = vmatprep.subr.mxu0 0.0
  %1259 = vmatpush2.msra.mxu0 0.0
  %1260 = vmatprep.subr.mxu0 0.0
  %1261 = vmatpush2.msra.mxu0 0.0
  %1262 = vmatprep.subr.mxu0 0.0
  %1263 = vmatpush2.msra.mxu0 0.0
  %1264 = vmatprep.subr.mxu0 0.0
  %1265 = vmatpush2.msra.mxu0 0.0
  %1266 = vmatprep.subr.mxu0 0.0
  %1267 = vmatpush2.msra.mxu0 0.0
  %1268 = vmatprep.mubr.f32.mxu0 0.0
  %1269 = vmatmul.mubr.f32.gmra.mxu0 %v668
  %v1270 = vpop.f32.mrf.mxu0
  %v1271 = vadd.f32 0.0, %v1270
  %v1272 = vpop.f32.mrf.mxu0
  %1273 = vmatprep.mubr.f32.mxu0 0.0
  %1274 = vmatmul.mubr.f32.gmra.mxu0 %v671
  %v1275 = vpop.f32.mrf.mxu0
  %v1276 = vadd.f32 0.0, %v1275
  %v1277 = vpop.f32.mrf.mxu0
  %1278 = vmatprep.mubr.f32.mxu0 0.0
  %1279 = vmatmul.mubr.f32.gmra.mxu0 %v674
  %v1280 = vpop.f32.mrf.mxu0
  %v1281 = vadd.f32 0.0, %v1280
  %v1282 = vpop.f32.mrf.mxu0
  %1283 = vmatprep.mubr.f32.mxu0 0.0
  %1284 = vmatmul.mubr.f32.gmra.mxu0 %v677
  %v1285 = vpop.f32.mrf.mxu0
  %v1286 = vadd.f32 0.0, %v1285
  %v1287 = vpop.f32.mrf.mxu0
  %1288 = vdwg.mxu0
  %v1289 = vadd.f32 %v1104, %v1271
  %v1290 = vadd.f32 %v1109, %v1276
  %v1291 = vadd.f32 %v1114, %v1281
  %v1292 = vadd.f32 %v1119, %v1286
  %v1293 = vld [vmem:[%s6 + $0x1] sm:$0x1]
  %v1294 = vlaneseq
  %v1295 = vshrl.u32 %v1294, 7
  %v1296 = vsub.s32 0, %v1295
  %v1297 = vrot.slane %v1293, %v1296
  %v1298 = vadd.f32 %v1289, %v1297
  %v1299 = vadd.f32 %v1290, %v1297
  %v1300 = vadd.f32 %v1291, %v1297
  %v1301 = vadd.f32 %v1292, %v1297
  %v1302 = vmax.f32 %v1298, 0.0
  %v1303 = vmax.f32 %v1299, 0.0
  %v1304 = vmax.f32 %v1300, 0.0
  %v1305 = vmax.f32 %v1301, 0.0
  %1308 = vrot.lane.b32.xlu0 %v1304, 64
  %v1309 = vpop.permute.xlu0 %1308
  %1310 = vrot.lane.b32.xlu0 %v1305, 64
  %v1311 = vpop.permute.xlu0 %1310
  %v1314 = vsel %vm151, %v1302, %v1309
  %v1315 = vsel %vm151, %v1303, %v1311
  %1316 = vst [vmem:[%s7] sm:$0xff] %v1314
  %1317 = vst [vmem:[%s7 + $0x8] sm:$0xff] %v1315
  // Predicated region
  $region30: #{upblock_attention_forward.1} parent=0 // pred_check
    _
  $region31: #{upblock_attention_forward.1} parent=0 // pred_check_branch
    %1319 = sbr.rel (0) target = $region33
  $region32: #{upblock_attention_forward.1} parent=0 // pred_region
    _
  $region33: #{upblock_attention_forward.1} parent=0 // pred_fallthru
    _
  // Predicated region
  $region34: #{upblock_attention_forward.1} parent=0 // pred_check
    _
  $region35: #{upblock_attention_forward.1} parent=0 // pred_check_branch
    %1321 = sbr.rel (0) target = $region37
  $region36: #{upblock_attention_forward.1} parent=0 // pred_region
    _
  $region37: #{upblock_attention_forward.1} parent=0 // pred_fallthru
    _

// kernel: upblock_attention_forward.1
$region0: #{upblock_attention_forward.1}
  #allocation0 [shape = 'u32[]', space=smem, size = 0x4, offset = 0x4, fixed_abs, tag = 'smem constant byte address 0x4 - core index']
  #allocation1 [shape = 'u32[144,128]{1,0:T(1,128)}', space=vmem, size = 0x12000, scoped, tag = 'internal scratch']
  %s0 = inlined_call_operand.vmem [shape: f32[16,32], index: 0, kind: input, shape index: {}]
  %s1 = inlined_call_operand.vmem [shape: f32[32,64], index: 1, kind: input, shape index: {}]
  %s2 = inlined_call_operand.vmem [shape: f32[32,16], index: 2, kind: input, shape index: {}]
  %s3 = inlined_call_operand.vmem [shape: f32[3,32,32], index: 3, kind: input, shape index: {}]
  %s4 = inlined_call_operand.vmem [shape: bf16[3,96,64], index: 4, kind: input, shape index: {}]
  %s5 = inlined_call_operand.vmem [shape: bf16[3,64,64], index: 5, kind: input, shape index: {}]
  %s6 = inlined_call_operand.vmem [shape: f32[2,64], index: 6, kind: input, shape index: {}]
  %s7 = inlined_call_operand.vmem [shape: f32[16,128], index: 7, kind: output, shape index: {}]
  %s8 = sld [smem:[#allocation0]]
  $region38: #{upblock_attention_forward.1} parent=0
    _
  %s10 = ssub.s32 1, %s8
  %s11 = scalar_select 0, %s10, %s8
  // Predicated region
  $region2: #{upblock_attention_forward.1} parent=0 // pred_check
    _
  $region3: #{upblock_attention_forward.1} parent=0 // pred_check_branch
    %13 = sbr.rel (0) target = $region5
  $region4: #{upblock_attention_forward.1} parent=0 // pred_region
    _
  $region5: #{upblock_attention_forward.1} parent=0 // pred_fallthru
    _
  // Predicated region
  $region6: #{upblock_attention_forward.1} parent=0 // pred_check
    _
  $region7: #{upblock_attention_forward.1} parent=0 // pred_check_branch
    %15 = sbr.rel (0) target = $region9
  $region8: #{upblock_attention_forward.1} parent=0 // pred_region
    _
  $region9: #{upblock_attention_forward.1} parent=0 // pred_fallthru
    _
  // Predicated region
  $region10: #{upblock_attention_forward.1} parent=0 // pred_check
    _
  $region11: #{upblock_attention_forward.1} parent=0 // pred_check_branch
    %17 = sbr.rel (0) target = $region13
  $region12: #{upblock_attention_forward.1} parent=0 // pred_region
    _
  $region13: #{upblock_attention_forward.1} parent=0 // pred_fallthru
    _
  // Predicated region
  $region14: #{upblock_attention_forward.1} parent=0 // pred_check
    _
  $region15: #{upblock_attention_forward.1} parent=0 // pred_check_branch
    %19 = sbr.rel (0) target = $region17
  $region16: #{upblock_attention_forward.1} parent=0 // pred_region
    _
  $region17: #{upblock_attention_forward.1} parent=0 // pred_fallthru
    _
  // Predicated region
  $region18: #{upblock_attention_forward.1} parent=0 // pred_check
    _
  $region19: #{upblock_attention_forward.1} parent=0 // pred_check_branch
    %21 = sbr.rel (0) target = $region21
  $region20: #{upblock_attention_forward.1} parent=0 // pred_region
    _
  $region21: #{upblock_attention_forward.1} parent=0 // pred_fallthru
    _
  // Predicated region
  $region22: #{upblock_attention_forward.1} parent=0 // pred_check
    _
  $region23: #{upblock_attention_forward.1} parent=0 // pred_check_branch
    %23 = sbr.rel (0) target = $region25
  $region24: #{upblock_attention_forward.1} parent=0 // pred_region
    _
  $region25: #{upblock_attention_forward.1} parent=0 // pred_fallthru
    _
  // Predicated region
  $region26: #{upblock_attention_forward.1} parent=0 // pred_check
    _
  $region27: #{upblock_attention_forward.1} parent=0 // pred_check_branch
    %25 = sbr.rel (0) target = $region29
  $region28: #{upblock_attention_forward.1} parent=0 // pred_region
    _
  $region29: #{upblock_attention_forward.1} parent=0 // pred_fallthru
    _
  %v27 = vld [vmem:[%s2] sm:$0xff]
  %v28 = vld [vmem:[%s2 + $0x8] sm:$0xff]
  %v29 = vld [vmem:[%s2 + $0x10] sm:$0xff]
  %v30 = vld [vmem:[%s2 + $0x18] sm:$0xff]
  %v31 = vld [vmem:[%s0] sm:$0xff]
  %v32 = vld [vmem:[%s0 + $0x8] sm:$0xff]
  %vm33 = vcmask 130048
  %v35 = vsel %vm33, %v27, 0
  %v38 = vsel %vm33, %v28, 0
  %v41 = vsel %vm33, %v29, 0
  %v44 = vsel %vm33, %v30, 0
  %46 = vmatprep.subr.mxu0 0.0
  %47 = vmatpush1.msra.mxu0 0.0
  %48 = vmatprep.subr.mxu0 0.0
  %49 = vmatpush1.msra.mxu0 0.0
  %50 = vmatprep.subr.mxu0 0.0
  %51 = vmatpush1.msra.mxu0 0.0
  %52 = vmatprep.subr.mxu0 0.0
  %53 = vmatpush1.msra.mxu0 0.0
  %54 = vmatprep.subr.mxu0 0.0
  %55 = vmatpush1.msra.mxu0 0.0
  %56 = vmatprep.subr.mxu0 0.0
  %57 = vmatpush1.msra.mxu0 0.0
  %58 = vmatprep.subr.mxu0 0.0
  %59 = vmatpush1.msra.mxu0 0.0
  %60 = vmatprep.subr.mxu0 0.0
  %61 = vmatpush1.msra.mxu0 0.0
  %62 = vmatprep.subr.mxu0 0.0
  %63 = vmatpush1.msra.mxu0 0.0
  %64 = vmatprep.subr.mxu0 0.0
  %65 = vmatpush1.msra.mxu0 0.0
  %66 = vmatprep.subr.mxu0 0.0
  %67 = vmatpush1.msra.mxu0 0.0
  %68 = vmatprep.subr.mxu0 0.0
  %69 = vmatpush1.msra.mxu0 0.0
  %70 = vmatprep.subr.mxu0 0.0
  %71 = vmatpush1.msra.mxu0 0.0
  %72 = vmatprep.subr.mxu0 0.0
  %73 = vmatpush1.msra.mxu0 0.0
  %74 = vmatprep.subr.mxu0 0.0
  %75 = vmatpush1.msra.mxu0 %v32
  %76 = vmatprep.subr.mxu0 0.0
  %77 = vmatpush1.msra.mxu0 %v31
  %78 = vmatprep.subr.mxu0 0.0
  %79 = vmatpush2.msra.mxu0 0.0
  %80 = vmatprep.subr.mxu0 0.0
  %81 = vmatpush2.msra.mxu0 0.0
  %82 = vmatprep.subr.mxu0 0.0
  %83 = vmatpush2.msra.mxu0 0.0
  %84 = vmatprep.subr.mxu0 0.0
  %85 = vmatpush2.msra.mxu0 0.0
  %86 = vmatprep.subr.mxu0 0.0
  %87 = vmatpush2.msra.mxu0 0.0
  %88 = vmatprep.subr.mxu0 0.0
  %89 = vmatpush2.msra.mxu0 0.0
  %90 = vmatprep.subr.mxu0 0.0
  %91 = vmatpush2.msra.mxu0 0.0
  %92 = vmatprep.subr.mxu0 0.0
  %93 = vmatpush2.msra.mxu0 0.0
  %94 = vmatprep.subr.mxu0 0.0
  %95 = vmatpush2.msra.mxu0 0.0
  %96 = vmatprep.subr.mxu0 0.0
  %97 = vmatpush2.msra.mxu0 0.0
  %98 = vmatprep.subr.mxu0 0.0
  %99 = vmatpush2.msra.mxu0 0.0
  %100 = vmatprep.subr.mxu0 0.0
  %101 = vmatpush2.msra.mxu0 0.0
  %102 = vmatprep.subr.mxu0 0.0
  %103 = vmatpush2.msra.mxu0 0.0
  %104 = vmatprep.subr.mxu0 0.0
  %105 = vmatpush2.msra.mxu0 0.0
  %106 = vmatprep.subr.mxu0 0.0
  %107 = vmatpush2.msra.mxu0 0.0
  %108 = vmatprep.subr.mxu0 0.0
  %109 = vmatpush2.msra.mxu0 0.0
  %110 = vmatprep.mubr.f32.mxu0 0.0
  %111 = vmatmul.mubr.f32.gmra.mxu0 %v35
  %v112 = vpop.f32.mrf.mxu0
  %v113 = vadd.f32 0.0, %v112
  %v114 = vpop.f32.mrf.mxu0
  %115 = vmatprep.mubr.f32.mxu0 0.0
  %116 = vmatmul.mubr.f32.gmra.mxu0 %v38
  %v117 = vpop.f32.mrf.mxu0
  %v118 = vadd.f32 0.0, %v117
  %v119 = vpop.f32.mrf.mxu0
  %120 = vmatprep.mubr.f32.mxu0 0.0
  %121 = vmatmul.mubr.f32.gmra.mxu0 %v41
  %v122 = vpop.f32.mrf.mxu0
  %v123 = vadd.f32 0.0, %v122
  %v124 = vpop.f32.mrf.mxu0
  %125 = vmatprep.mubr.f32.mxu0 0.0
  %126 = vmatmul.mubr.f32.gmra.mxu0 %v44
  %v127 = vpop.f32.mrf.mxu0
  %v128 = vadd.f32 0.0, %v127
  %v129 = vpop.f32.mrf.mxu0
  %130 = vdwg.mxu0
  %v131 = vld [vmem:[%s1] sm:$0xff]
  %v132 = vld [vmem:[%s1 + $0x8] sm:$0xff]
  %v133 = vld [vmem:[%s1 + $0x10] sm:$0xff]
  %v134 = vld [vmem:[%s1 + $0x18] sm:$0xff]
  %139 = vrot.lane.b32.xlu0 %v113, 64
  %v140 = vpop.permute.xlu0 %139
  %141 = vrot.lane.b32.xlu0 %v118, 64
  %v142 = vpop.permute.xlu0 %141
  %143 = vrot.lane.b32.xlu0 %v123, 64
  %v144 = vpop.permute.xlu0 %143
  %145 = vrot.lane.b32.xlu0 %v128, 64
  %v146 = vpop.permute.xlu0 %145
  %vm151 = vcmask 523264
  %v152 = vsel %vm151, %v131, %v140
  %v153 = vsel %vm151, %v132, %v142
  %v154 = vsel %vm151, %v133, %v144
  %v155 = vsel %vm151, %v134, %v146
  %v156 = vpack.c.bf16 %v153, %v152
  %v157 = vpack.c.bf16 %v155, %v154
  %v158 = vld [vmem:[%s3] sm:$0xff]
  %v159 = vld [vmem:[%s3 + $0x8] sm:$0xff]
  %v160 = vld [vmem:[%s3 + $0x10] sm:$0xff]
  %v161 = vld [vmem:[%s3 + $0x18] sm:$0xff]
  %v162 = vld [vmem:[%s4] sm:$0xf]
  %v163 = vld [vmem:[%s4 + $0x4] sm:$0xf]
  %v164 = vld [vmem:[%s4 + $0x8] sm:$0xf]
  %v165 = vld [vmem:[%s4 + $0xc] sm:$0xf]
  %v166 = vld [vmem:[%s4 + $0x10] sm:$0xf]
  %v167 = vld [vmem:[%s4 + $0x14] sm:$0xf]
  %v168 = vld [vmem:[%s4 + $0x18] sm:$0xf]
  %v169 = vld [vmem:[%s4 + $0x1c] sm:$0xf]
  %v170 = vld [vmem:[%s4 + $0x20] sm:$0xf]
  %v171 = vld [vmem:[%s4 + $0x24] sm:$0xf]
  %v172 = vld [vmem:[%s4 + $0x28] sm:$0xf]
  %v173 = vld [vmem:[%s4 + $0x2c] sm:$0xf]
  %v186 = vunpack.c.l.b16 %v162
  %v187 = vunpack.c.l.b16 %v163
  %v188 = vunpack.c.l.b16 %v164
  %v189 = vunpack.c.l.b16 %v165
  %v190 = vunpack.c.l.b16 %v166
  %v191 = vunpack.c.l.b16 %v167
  %v192 = vunpack.c.l.b16 %v168
  %v193 = vunpack.c.l.b16 %v169
  %v194 = vunpack.c.l.b16 %v170
  %v195 = vunpack.c.l.b16 %v171
  %v196 = vunpack.c.l.b16 %v172
  %v197 = vunpack.c.l.b16 %v173
  %v198 = vpack.c.b16 %v187, %v186
  %v199 = vpack.c.b16 %v189, %v188
  %v200 = vpack.c.b16 %v191, %v190
  %v201 = vpack.c.b16 %v193, %v192
  %v202 = vpack.c.b16 %v195, %v194
  %v203 = vpack.c.b16 %v197, %v196
  %vm210 = vcmask 785408
  %v212 = vsel %vm210, %v156, 0
  %v215 = vsel %vm210, %v157, 0
  %217 = vmatprep.subr.bf16.mxu0 0
  %218 = vmatpush1.bf16.msra.mxu0 0
  %219 = vmatprep.subr.bf16.mxu0 0
  %220 = vmatpush1.bf16.msra.mxu0 0
  %221 = vmatprep.subr.bf16.mxu0 0
  %222 = vmatpush1.bf16.msra.mxu0 %v203
  %223 = vmatprep.subr.bf16.mxu0 0
  %224 = vmatpush1.bf16.msra.mxu0 %v202
  %225 = vmatprep.subr.bf16.mxu0 0
  %226 = vmatpush1.bf16.msra.mxu0 %v201
  %227 = vmatprep.subr.bf16.mxu0 0
  %228 = vmatpush1.bf16.msra.mxu0 %v200
  %229 = vmatprep.subr.bf16.mxu0 0
  %230 = vmatpush1.bf16.msra.mxu0 %v199
  %231 = vmatprep.subr.bf16.mxu0 0
  %232 = vmatpush1.bf16.msra.mxu0 %v198
  %233 = vmatprep.subr.bf16.mxu0 0
  %234 = vmatpush2.bf16.msra.mxu0 0
  %235 = vmatprep.subr.bf16.mxu0 0
  %236 = vmatpush2.bf16.msra.mxu0 0
  %237 = vmatprep.subr.bf16.mxu0 0
  %238 = vmatpush2.bf16.msra.mxu0 0
  %239 = vmatprep.subr.bf16.mxu0 0
  %240 = vmatpush2.bf16.msra.mxu0 0
  %241 = vmatprep.subr.bf16.mxu0 0
  %242 = vmatpush2.bf16.msra.mxu0 0
  %243 = vmatprep.subr.bf16.mxu0 0
  %244 = vmatpush2.bf16.msra.mxu0 0
  %245 = vmatprep.subr.bf16.mxu0 0
  %246 = vmatpush2.bf16.msra.mxu0 0
  %247 = vmatprep.subr.bf16.mxu0 0
  %248 = vmatpush2.bf16.msra.mxu0 0
  %249 = vmatprep.mubr.bf16.mxu0 0
  %250 = vmatmul.mubr.bf16.gmra.mxu0 %v212
  %v251 = vpop.f32.mrf.mxu0
  %v252 = vadd.f32 0.0, %v251
  %v253 = vpop.f32.mrf.mxu0
  %v254 = vpop.f32.mrf.mxu0
  %v255 = vadd.f32 0.0, %v254
  %v256 = vpop.f32.mrf.mxu0
  %257 = vmatprep.mubr.bf16.mxu0 0
  %258 = vmatmul.mubr.bf16.gmra.mxu0 %v215
  %v259 = vpop.f32.mrf.mxu0
  %v260 = vadd.f32 0.0, %v259
  %v261 = vpop.f32.mrf.mxu0
  %v262 = vpop.f32.mrf.mxu0
  %v263 = vadd.f32 0.0, %v262
  %v264 = vpop.f32.mrf.mxu0
  %265 = vdwg.mxu0
  %s266 = scalar_lea.vmem %s3, 32
  %v267 = vld [vmem:[%s266] sm:$0xff]
  %v268 = vld [vmem:[%s266 + $0x8] sm:$0xff]
  %v269 = vld [vmem:[%s266 + $0x10] sm:$0xff]
  %v270 = vld [vmem:[%s266 + $0x18] sm:$0xff]
  %s271 = scalar_lea.vmem %s4, 48
  %v272 = vld [vmem:[%s271] sm:$0xf]
  %v273 = vld [vmem:[%s271 + $0x4] sm:$0xf]
  %v274 = vld [vmem:[%s271 + $0x8] sm:$0xf]
  %v275 = vld [vmem:[%s271 + $0xc] sm:$0xf]
  %v276 = vld [vmem:[%s271 + $0x10] sm:$0xf]
  %v277 = vld [vmem:[%s271 + $0x14] sm:$0xf]
  %v278 = vld [vmem:[%s271 + $0x18] sm:$0xf]
  %v279 = vld [vmem:[%s271 + $0x1c] sm:$0xf]
  %v280 = vld [vmem:[%s271 + $0x20] sm:$0xf]
  %v281 = vld [vmem:[%s271 + $0x24] sm:$0xf]
  %v282 = vld [vmem:[%s271 + $0x28] sm:$0xf]
  %v283 = vld [vmem:[%s271 + $0x2c] sm:$0xf]
  %v296 = vunpack.c.l.b16 %v272
  %v297 = vunpack.c.l.b16 %v273
  %v298 = vunpack.c.l.b16 %v274
  %v299 = vunpack.c.l.b16 %v275
  %v300 = vunpack.c.l.b16 %v276
  %v301 = vunpack.c.l.b16 %v277
  %v302 = vunpack.c.l.b16 %v278
  %v303 = vunpack.c.l.b16 %v279
  %v304 = vunpack.c.l.b16 %v280
  %v305 = vunpack.c.l.b16 %v281
  %v306 = vunpack.c.l.b16 %v282
  %v307 = vunpack.c.l.b16 %v283
  %v308 = vpack.c.b16 %v297, %v296
  %v309 = vpack.c.b16 %v299, %v298
  %v310 = vpack.c.b16 %v301, %v300
  %v311 = vpack.c.b16 %v303, %v302
  %v312 = vpack.c.b16 %v305, %v304
  %v313 = vpack.c.b16 %v307, %v306
  %320 = vmatprep.subr.bf16.mxu0 0
  %321 = vmatpush1.bf16.msra.mxu0 0
  %322 = vmatprep.subr.bf16.mxu0 0
  %323 = vmatpush1.bf16.msra.mxu0 0
  %324 = vmatprep.subr.bf16.mxu0 0
  %325 = vmatpush1.bf16.msra.mxu0 %v313
  %326 = vmatprep.subr.bf16.mxu0 0
  %327 = vmatpush1.bf16.msra.mxu0 %v312
  %328 = vmatprep.subr.bf16.mxu0 0
  %329 = vmatpush1.bf16.msra.mxu0 %v311
  %330 = vmatprep.subr.bf16.mxu0 0
  %331 = vmatpush1.bf16.msra.mxu0 %v310
  %332 = vmatprep.subr.bf16.mxu0 0
  %333 = vmatpush1.bf16.msra.mxu0 %v309
  %334 = vmatprep.subr.bf16.mxu0 0
  %335 = vmatpush1.bf16.msra.mxu0 %v308
  %336 = vmatprep.subr.bf16.mxu0 0
  %337 = vmatpush2.bf16.msra.mxu0 0
  %338 = vmatprep.subr.bf16.mxu0 0
  %339 = vmatpush2.bf16.msra.mxu0 0
  %340 = vmatprep.subr.bf16.mxu0 0
  %341 = vmatpush2.bf16.msra.mxu0 0
  %342 = vmatprep.subr.bf16.mxu0 0
  %343 = vmatpush2.bf16.msra.mxu0 0
  %344 = vmatprep.subr.bf16.mxu0 0
  %345 = vmatpush2.bf16.msra.mxu0 0
  %346 = vmatprep.subr.bf16.mxu0 0
  %347 = vmatpush2.bf16.msra.mxu0 0
  %348 = vmatprep.subr.bf16.mxu0 0
  %349 = vmatpush2.bf16.msra.mxu0 0
  %350 = vmatprep.subr.bf16.mxu0 0
  %351 = vmatpush2.bf16.msra.mxu0 0
  %352 = vmatprep.mubr.bf16.mxu0 0
  %353 = vmatmul.mubr.bf16.gmra.mxu0 %v212
  %v354 = vpop.f32.mrf.mxu0
  %v355 = vadd.f32 0.0, %v354
  %v356 = vpop.f32.mrf.mxu0
  %v357 = vpop.f32.mrf.mxu0
  %v358 = vadd.f32 0.0, %v357
  %v359 = vpop.f32.mrf.mxu0
  %360 = vmatprep.mubr.bf16.mxu0 0
  %361 = vmatmul.mubr.bf16.gmra.mxu0 %v215
  %v362 = vpop.f32.mrf.mxu0
  %v363 = vadd.f32 0.0, %v362
  %v364 = vpop.f32.mrf.mxu0
  %v365 = vpop.f32.mrf.mxu0
  %v366 = vadd.f32 0.0, %v365
  %v367 = vpop.f32.mrf.mxu0
  %368 = vdwg.mxu0
  %vm369 = vcmask 261120
  %v371 = vsel %vm369, %v267, 0
  %v374 = vsel %vm369, %v268, 0
  %v377 = vsel %vm369, %v269, 0
  %v380 = vsel %vm369, %v270, 0
  %382 = vmatprep.subr.mxu0 0.0
  %383 = vmatpush1.msra.mxu0 0.0
  %384 = vmatprep.subr.mxu0 0.0
  %385 = vmatpush1.msra.mxu0 0.0
  %386 = vmatprep.subr.mxu0 0.0
  %387 = vmatpush1.msra.mxu0 0.0
  %388 = vmatprep.subr.mxu0 0.0
  %389 = vmatpush1.msra.mxu0 0.0
  %390 = vmatprep.subr.mxu0 0.0
  %391 = vmatpush1.msra.mxu0 0.0
  %392 = vmatprep.subr.mxu0 0.0
  %393 = vmatpush1.msra.mxu0 0.0
  %394 = vmatprep.subr.mxu0 0.0
  %395 = vmatpush1.msra.mxu0 0.0
  %396 = vmatprep.subr.mxu0 0.0
  %397 = vmatpush1.msra.mxu0 0.0
  %398 = vmatprep.subr.mxu0 0.0
  %399 = vmatpush1.msra.mxu0 0.0
  %400 = vmatprep.subr.mxu0 0.0
  %401 = vmatpush1.msra.mxu0 0.0
  %402 = vmatprep.subr.mxu0 0.0
  %403 = vmatpush1.msra.mxu0 0.0
  %404 = vmatprep.subr.mxu0 0.0
  %405 = vmatpush1.msra.mxu0 0.0
  %406 = vmatprep.subr.mxu0 0.0
  %407 = vmatpush1.msra.mxu0 %v366
  %408 = vmatprep.subr.mxu0 0.0
  %409 = vmatpush1.msra.mxu0 %v363
  %410 = vmatprep.subr.mxu0 0.0
  %411 = vmatpush1.msra.mxu0 %v358
  %412 = vmatprep.subr.mxu0 0.0
  %413 = vmatpush1.msra.mxu0 %v355
  %414 = vmatprep.subr.mxu0 0.0
  %415 = vmatpush2.msra.mxu0 0.0
  %416 = vmatprep.subr.mxu0 0.0
  %417 = vmatpush2.msra.mxu0 0.0
  %418 = vmatprep.subr.mxu0 0.0
  %419 = vmatpush2.msra.mxu0 0.0
  %420 = vmatprep.subr.mxu0 0.0
  %421 = vmatpush2.msra.mxu0 0.0
  %422 = vmatprep.subr.mxu0 0.0
  %423 = vmatpush2.msra.mxu0 0.0
  %424 = vmatprep.subr.mxu0 0.0
  %425 = vmatpush2.msra.mxu0 0.0
  %426 = vmatprep.subr.mxu0 0.0
  %427 = vmatpush2.msra.mxu0 0.0
  %428 = vmatprep.subr.mxu0 0.0
  %429 = vmatpush2.msra.mxu0 0.0
  %430 = vmatprep.subr.mxu0 0.0
  %431 = vmatpush2.msra.mxu0 0.0
  %432 = vmatprep.subr.mxu0 0.0
  %433 = vmatpush2.msra.mxu0 0.0
  %434 = vmatprep.subr.mxu0 0.0
  %435 = vmatpush2.msra.mxu0 0.0
  %436 = vmatprep.subr.mxu0 0.0
  %437 = vmatpush2.msra.mxu0 0.0
  %438 = vmatprep.subr.mxu0 0.0
  %439 = vmatpush2.msra.mxu0 0.0
  %440 = vmatprep.subr.mxu0 0.0
  %441 = vmatpush2.msra.mxu0 0.0
  %442 = vmatprep.subr.mxu0 0.0
  %443 = vmatpush2.msra.mxu0 0.0
  %444 = vmatprep.subr.mxu0 0.0
  %445 = vmatpush2.msra.mxu0 0.0
  %446 = vmatprep.mubr.f32.mxu0 0.0
  %447 = vmatmul.mubr.f32.gmra.mxu0 %v371
  %v448 = vpop.f32.mrf.mxu0
  %v449 = vadd.f32 0.0, %v448
  %v450 = vpop.f32.mrf.mxu0
  %451 = vmatprep.mubr.f32.mxu0 0.0
  %452 = vmatmul.mubr.f32.gmra.mxu0 %v374
  %v453 = vpop.f32.mrf.mxu0
  %v454 = vadd.f32 0.0, %v453
  %v455 = vpop.f32.mrf.mxu0
  %456 = vmatprep.mubr.f32.mxu0 0.0
  %457 = vmatmul.mubr.f32.gmra.mxu0 %v377
  %v458 = vpop.f32.mrf.mxu0
  %v459 = vadd.f32 0.0, %v458
  %v460 = vpop.f32.mrf.mxu0
  %461 = vmatprep.mubr.f32.mxu0 0.0
  %462 = vmatmul.mubr.f32.gmra.mxu0 %v380
  %v463 = vpop.f32.mrf.mxu0
  %v464 = vadd.f32 0.0, %v463
  %v465 = vpop.f32.mrf.mxu0
  %466 = vdwg.mxu0
  %v468 = vsel %vm369, %v158, 0
  %v471 = vsel %vm369, %v159, 0
  %v474 = vsel %vm369, %v160, 0
  %v477 = vsel %vm369, %v161, 0
  %479 = vmatprep.subr.mxu0 0.0
  %480 = vmatpush1.msra.mxu0 0.0
  %481 = vmatprep.subr.mxu0 0.0
  %482 = vmatpush1.msra.mxu0 0.0
  %483 = vmatprep.subr.mxu0 0.0
  %484 = vmatpush1.msra.mxu0 0.0
  %485 = vmatprep.subr.mxu0 0.0
  %486 = vmatpush1.msra.mxu0 0.0
  %487 = vmatprep.subr.mxu0 0.0
  %488 = vmatpush1.msra.mxu0 0.0
  %489 = vmatprep.subr.mxu0 0.0
  %490 = vmatpush1.msra.mxu0 0.0
  %491 = vmatprep.subr.mxu0 0.0
  %492 = vmatpush1.msra.mxu0 0.0
  %493 = vmatprep.subr.mxu0 0.0
  %494 = vmatpush1.msra.mxu0 0.0
  %495 = vmatprep.subr.mxu0 0.0
  %496 = vmatpush1.msra.mxu0 0.0
  %497 = vmatprep.subr.mxu0 0.0
  %498 = vmatpush1.msra.mxu0 0.0
  %499 = vmatprep.subr.mxu0 0.0
  %500 = vmatpush1.msra.mxu0 0.0
  %501 = vmatprep.subr.mxu0 0.0
  %502 = vmatpush1.msra.mxu0 0.0
  %503 = vmatprep.subr.mxu0 0.0
  %504 = vmatpush1.msra.mxu0 %v263
  %505 = vmatprep.subr.mxu0 0.0
  %506 = vmatpush1.msra.mxu0 %v260
  %507 = vmatprep.subr.mxu0 0.0
  %508 = vmatpush1.msra.mxu0 %v255
  %509 = vmatprep.subr.mxu0 0.0
  %510 = vmatpush1.msra.mxu0 %v252
  %511 = vmatprep.subr.mxu0 0.0
  %512 = vmatpush2.msra.mxu0 0.0
  %513 = vmatprep.subr.mxu0 0.0
  %514 = vmatpush2.msra.mxu0 0.0
  %515 = vmatprep.subr.mxu0 0.0
  %516 = vmatpush2.msra.mxu0 0.0
  %517 = vmatprep.subr.mxu0 0.0
  %518 = vmatpush2.msra.mxu0 0.0
  %519 = vmatprep.subr.mxu0 0.0
  %520 = vmatpush2.msra.mxu0 0.0
  %521 = vmatprep.subr.mxu0 0.0
  %522 = vmatpush2.msra.mxu0 0.0
  %523 = vmatprep.subr.mxu0 0.0
  %524 = vmatpush2.msra.mxu0 0.0
  %525 = vmatprep.subr.mxu0 0.0
  %526 = vmatpush2.msra.mxu0 0.0
  %527 = vmatprep.subr.mxu0 0.0
  %528 = vmatpush2.msra.mxu0 0.0
  %529 = vmatprep.subr.mxu0 0.0
  %530 = vmatpush2.msra.mxu0 0.0
  %531 = vmatprep.subr.mxu0 0.0
  %532 = vmatpush2.msra.mxu0 0.0
  %533 = vmatprep.subr.mxu0 0.0
  %534 = vmatpush2.msra.mxu0 0.0
  %535 = vmatprep.subr.mxu0 0.0
  %536 = vmatpush2.msra.mxu0 0.0
  %537 = vmatprep.subr.mxu0 0.0
  %538 = vmatpush2.msra.mxu0 0.0
  %539 = vmatprep.subr.mxu0 0.0
  %540 = vmatpush2.msra.mxu0 0.0
  %541 = vmatprep.subr.mxu0 0.0
  %542 = vmatpush2.msra.mxu0 0.0
  %543 = vmatprep.mubr.f32.mxu0 0.0
  %544 = vmatmul.mubr.f32.gmra.mxu0 %v468
  %v545 = vpop.f32.mrf.mxu0
  %v546 = vadd.f32 %v449, %v545
  %v547 = vpop.f32.mrf.mxu0
  %548 = vmatprep.mubr.f32.mxu0 0.0
  %549 = vmatmul.mubr.f32.gmra.mxu0 %v471
  %v550 = vpop.f32.mrf.mxu0
  %v551 = vadd.f32 %v454, %v550
  %v552 = vpop.f32.mrf.mxu0
  %553 = vmatprep.mubr.f32.mxu0 0.0
  %554 = vmatmul.mubr.f32.gmra.mxu0 %v474
  %v555 = vpop.f32.mrf.mxu0
  %v556 = vadd.f32 %v459, %v555
  %v557 = vpop.f32.mrf.mxu0
  %558 = vmatprep.mubr.f32.mxu0 0.0
  %559 = vmatmul.mubr.f32.gmra.mxu0 %v477
  %v560 = vpop.f32.mrf.mxu0
  %v561 = vadd.f32 %v464, %v560
  %v562 = vpop.f32.mrf.mxu0
  %563 = vdwg.mxu0
  %s564 = scalar_lea.vmem %s3, 64
  %v565 = vld [vmem:[%s564] sm:$0xff]
  %v566 = vld [vmem:[%s564 + $0x8] sm:$0xff]
  %v567 = vld [vmem:[%s564 + $0x10] sm:$0xff]
  %v568 = vld [vmem:[%s564 + $0x18] sm:$0xff]
  %s569 = scalar_lea.vmem %s4, 96
  %v570 = vld [vmem:[%s569] sm:$0xf]
  %v571 = vld [vmem:[%s569 + $0x4] sm:$0xf]
  %v572 = vld [vmem:[%s569 + $0x8] sm:$0xf]
  %v573 = vld [vmem:[%s569 + $0xc] sm:$0xf]
  %v574 = vld [vmem:[%s569 + $0x10] sm:$0xf]
  %v575 = vld [vmem:[%s569 + $0x14] sm:$0xf]
  %v576 = vld [vmem:[%s569 + $0x18] sm:$0xf]
  %v577 = vld [vmem:[%s569 + $0x1c] sm:$0xf]
  %v578 = vld [vmem:[%s569 + $0x20] sm:$0xf]
  %v579 = vld [vmem:[%s569 + $0x24] sm:$0xf]
  %v580 = vld [vmem:[%s569 + $0x28] sm:$0xf]
  %v581 = vld [vmem:[%s569 + $0x2c] sm:$0xf]
  %v594 = vunpack.c.l.b16 %v570
  %v595 = vunpack.c.l.b16 %v571
  %v596 = vunpack.c.l.b16 %v572
  %v597 = vunpack.c.l.b16 %v573
  %v598 = vunpack.c.l.b16 %v574
  %v599 = vunpack.c.l.b16 %v575
  %v600 = vunpack.c.l.b16 %v576
  %v601 = vunpack.c.l.b16 %v577
  %v602 = vunpack.c.l.b16 %v578
  %v603 = vunpack.c.l.b16 %v579
  %v604 = vunpack.c.l.b16 %v580
  %v605 = vunpack.c.l.b16 %v581
  %v606 = vpack.c.b16 %v595, %v594
  %v607 = vpack.c.b16 %v597, %v596
  %v608 = vpack.c.b16 %v599, %v598
  %v609 = vpack.c.b16 %v601, %v600
  %v610 = vpack.c.b16 %v603, %v602
  %v611 = vpack.c.b16 %v605, %v604
  %618 = vmatprep.subr.bf16.mxu0 0
  %619 = vmatpush1.bf16.msra.mxu0 0
  %620 = vmatprep.subr.bf16.mxu0 0
  %621 = vmatpush1.bf16.msra.mxu0 0
  %622 = vmatprep.subr.bf16.mxu0 0
  %623 = vmatpush1.bf16.msra.mxu0 %v611
  %624 = vmatprep.subr.bf16.mxu0 0
  %625 = vmatpush1.bf16.msra.mxu0 %v610
  %626 = vmatprep.subr.bf16.mxu0 0
  %627 = vmatpush1.bf16.msra.mxu0 %v609
  %628 = vmatprep.subr.bf16.mxu0 0
  %629 = vmatpush1.bf16.msra.mxu0 %v608
  %630 = vmatprep.subr.bf16.mxu0 0
  %631 = vmatpush1.bf16.msra.mxu0 %v607
  %632 = vmatprep.subr.bf16.mxu0 0
  %633 = vmatpush1.bf16.msra.mxu0 %v606
  %634 = vmatprep.subr.bf16.mxu0 0
  %635 = vmatpush2.bf16.msra.mxu0 0
  %636 = vmatprep.subr.bf16.mxu0 0
  %637 = vmatpush2.bf16.msra.mxu0 0
  %638 = vmatprep.subr.bf16.mxu0 0
  %639 = vmatpush2.bf16.msra.mxu0 0
  %640 = vmatprep.subr.bf16.mxu0 0
  %641 = vmatpush2.bf16.msra.mxu0 0
  %642 = vmatprep.subr.bf16.mxu0 0
  %643 = vmatpush2.bf16.msra.mxu0 0
  %644 = vmatprep.subr.bf16.mxu0 0
  %645 = vmatpush2.bf16.msra.mxu0 0
  %646 = vmatprep.subr.bf16.mxu0 0
  %647 = vmatpush2.bf16.msra.mxu0 0
  %648 = vmatprep.subr.bf16.mxu0 0
  %649 = vmatpush2.bf16.msra.mxu0 0
  %650 = vmatprep.mubr.bf16.mxu0 0
  %651 = vmatmul.mubr.bf16.gmra.mxu0 %v212
  %v652 = vpop.f32.mrf.mxu0
  %v653 = vadd.f32 0.0, %v652
  %v654 = vpop.f32.mrf.mxu0
  %v655 = vpop.f32.mrf.mxu0
  %v656 = vadd.f32 0.0, %v655
  %v657 = vpop.f32.mrf.mxu0
  %658 = vmatprep.mubr.bf16.mxu0 0
  %659 = vmatmul.mubr.bf16.gmra.mxu0 %v215
  %v660 = vpop.f32.mrf.mxu0
  %v661 = vadd.f32 0.0, %v660
  %v662 = vpop.f32.mrf.mxu0
  %v663 = vpop.f32.mrf.mxu0
  %v664 = vadd.f32 0.0, %v663
  %v665 = vpop.f32.mrf.mxu0
  %666 = vdwg.mxu0
  %v668 = vsel %vm369, %v565, 0
  %v671 = vsel %vm369, %v566, 0
  %v674 = vsel %vm369, %v567, 0
  %v677 = vsel %vm369, %v568, 0
  %679 = vmatprep.subr.mxu0 0.0
  %680 = vmatpush1.msra.mxu0 0.0
  %681 = vmatprep.subr.mxu0 0.0
  %682 = vmatpush1.msra.mxu0 0.0
  %683 = vmatprep.subr.mxu0 0.0
  %684 = vmatpush1.msra.mxu0 0.0
  %685 = vmatprep.subr.mxu0 0.0
  %686 = vmatpush1.msra.mxu0 0.0
  %687 = vmatprep.subr.mxu0 0.0
  %688 = vmatpush1.msra.mxu0 0.0
  %689 = vmatprep.subr.mxu0 0.0
  %690 = vmatpush1.msra.mxu0 0.0
  %691 = vmatprep.subr.mxu0 0.0
  %692 = vmatpush1.msra.mxu0 0.0
  %693 = vmatprep.subr.mxu0 0.0
  %694 = vmatpush1.msra.mxu0 0.0
  %695 = vmatprep.subr.mxu0 0.0
  %696 = vmatpush1.msra.mxu0 0.0
  %697 = vmatprep.subr.mxu0 0.0
  %698 = vmatpush1.msra.mxu0 0.0
  %699 = vmatprep.subr.mxu0 0.0
  %700 = vmatpush1.msra.mxu0 0.0
  %701 = vmatprep.subr.mxu0 0.0
  %702 = vmatpush1.msra.mxu0 0.0
  %703 = vmatprep.subr.mxu0 0.0
  %704 = vmatpush1.msra.mxu0 %v664
  %705 = vmatprep.subr.mxu0 0.0
  %706 = vmatpush1.msra.mxu0 %v661
  %707 = vmatprep.subr.mxu0 0.0
  %708 = vmatpush1.msra.mxu0 %v656
  %709 = vmatprep.subr.mxu0 0.0
  %710 = vmatpush1.msra.mxu0 %v653
  %711 = vmatprep.subr.mxu0 0.0
  %712 = vmatpush2.msra.mxu0 0.0
  %713 = vmatprep.subr.mxu0 0.0
  %714 = vmatpush2.msra.mxu0 0.0
  %715 = vmatprep.subr.mxu0 0.0
  %716 = vmatpush2.msra.mxu0 0.0
  %717 = vmatprep.subr.mxu0 0.0
  %718 = vmatpush2.msra.mxu0 0.0
  %719 = vmatprep.subr.mxu0 0.0
  %720 = vmatpush2.msra.mxu0 0.0
  %721 = vmatprep.subr.mxu0 0.0
  %722 = vmatpush2.msra.mxu0 0.0
  %723 = vmatprep.subr.mxu0 0.0
  %724 = vmatpush2.msra.mxu0 0.0
  %725 = vmatprep.subr.mxu0 0.0
  %726 = vmatpush2.msra.mxu0 0.0
  %727 = vmatprep.subr.mxu0 0.0
  %728 = vmatpush2.msra.mxu0 0.0
  %729 = vmatprep.subr.mxu0 0.0
  %730 = vmatpush2.msra.mxu0 0.0
  %731 = vmatprep.subr.mxu0 0.0
  %732 = vmatpush2.msra.mxu0 0.0
  %733 = vmatprep.subr.mxu0 0.0
  %734 = vmatpush2.msra.mxu0 0.0
  %735 = vmatprep.subr.mxu0 0.0
  %736 = vmatpush2.msra.mxu0 0.0
  %737 = vmatprep.subr.mxu0 0.0
  %738 = vmatpush2.msra.mxu0 0.0
  %739 = vmatprep.subr.mxu0 0.0
  %740 = vmatpush2.msra.mxu0 0.0
  %741 = vmatprep.subr.mxu0 0.0
  %742 = vmatpush2.msra.mxu0 0.0
  %743 = vmatprep.mubr.f32.mxu0 0.0
  %744 = vmatmul.mubr.f32.gmra.mxu0 %v668
  %v745 = vpop.f32.mrf.mxu0
  %v746 = vadd.f32 0.0, %v745
  %v747 = vpop.f32.mrf.mxu0
  %748 = vmatprep.mubr.f32.mxu0 0.0
  %749 = vmatmul.mubr.f32.gmra.mxu0 %v671
  %v750 = vpop.f32.mrf.mxu0
  %v751 = vadd.f32 0.0, %v750
  %v752 = vpop.f32.mrf.mxu0
  %753 = vmatprep.mubr.f32.mxu0 0.0
  %754 = vmatmul.mubr.f32.gmra.mxu0 %v674
  %v755 = vpop.f32.mrf.mxu0
  %v756 = vadd.f32 0.0, %v755
  %v757 = vpop.f32.mrf.mxu0
  %758 = vmatprep.mubr.f32.mxu0 0.0
  %759 = vmatmul.mubr.f32.gmra.mxu0 %v677
  %v760 = vpop.f32.mrf.mxu0
  %v761 = vadd.f32 0.0, %v760
  %v762 = vpop.f32.mrf.mxu0
  %763 = vdwg.mxu0
  %v764 = vadd.f32 %v546, %v746
  %v765 = vadd.f32 %v551, %v751
  %v766 = vadd.f32 %v556, %v756
  %v767 = vadd.f32 %v561, %v761
  %v768 = vld [vmem:[%s6] sm:$0x1]
  %v769 = vlaneseq
  %v770 = vshrl.u32 %v769, 7
  %v771 = vsub.s32 0, %v770
  %v772 = vrot.slane %v768, %v771
  %v773 = vadd.f32 %v764, %v772
  %v774 = vadd.f32 %v765, %v772
  %v775 = vadd.f32 %v766, %v772
  %v776 = vadd.f32 %v767, %v772
  %v777 = vmax.f32 %v773, 0.0
  %v778 = vmax.f32 %v774, 0.0
  %v779 = vmax.f32 %v775, 0.0
  %v780 = vmax.f32 %v776, 0.0
  %v781 = vpack.c.bf16 %v778, %v777
  %v782 = vpack.c.bf16 %v780, %v779
  %v783 = vld [vmem:[%s5] sm:$0xf]
  %v784 = vld [vmem:[%s5 + $0x4] sm:$0xf]
  %v785 = vld [vmem:[%s5 + $0x8] sm:$0xf]
  %v786 = vld [vmem:[%s5 + $0xc] sm:$0xf]
  %v787 = vld [vmem:[%s5 + $0x10] sm:$0xf]
  %v788 = vld [vmem:[%s5 + $0x14] sm:$0xf]
  %v789 = vld [vmem:[%s5 + $0x18] sm:$0xf]
  %v790 = vld [vmem:[%s5 + $0x1c] sm:$0xf]
  %v799 = vunpack.c.l.b16 %v783
  %v800 = vunpack.c.l.b16 %v784
  %v801 = vunpack.c.l.b16 %v785
  %v802 = vunpack.c.l.b16 %v786
  %v803 = vunpack.c.l.b16 %v787
  %v804 = vunpack.c.l.b16 %v788
  %v805 = vunpack.c.l.b16 %v789
  %v806 = vunpack.c.l.b16 %v790
  %v807 = vpack.c.b16 %v800, %v799
  %v808 = vpack.c.b16 %v802, %v801
  %v809 = vpack.c.b16 %v804, %v803
  %v810 = vpack.c.b16 %v806, %v805
  %v816 = vsel %vm151, %v781, 0
  %v819 = vsel %vm151, %v782, 0
  %821 = vmatprep.subr.bf16.mxu0 0
  %822 = vmatpush1.bf16.msra.mxu0 0
  %823 = vmatprep.subr.bf16.mxu0 0
  %824 = vmatpush1.bf16.msra.mxu0 0
  %825 = vmatprep.subr.bf16.mxu0 0
  %826 = vmatpush1.bf16.msra.mxu0 0
  %827 = vmatprep.subr.bf16.mxu0 0
  %828 = vmatpush1.bf16.msra.mxu0 0
  %829 = vmatprep.subr.bf16.mxu0 0
  %830 = vmatpush1.bf16.msra.mxu0 %v810
  %831 = vmatprep.subr.bf16.mxu0 0
  %832 = vmatpush1.bf16.msra.mxu0 %v809
  %833 = vmatprep.subr.bf16.mxu0 0
  %834 = vmatpush1.bf16.msra.mxu0 %v808
  %835 = vmatprep.subr.bf16.mxu0 0
  %836 = vmatpush1.bf16.msra.mxu0 %v807
  %837 = vmatprep.subr.bf16.mxu0 0
  %838 = vmatpush2.bf16.msra.mxu0 0
  %839 = vmatprep.subr.bf16.mxu0 0
  %840 = vmatpush2.bf16.msra.mxu0 0
  %841 = vmatprep.subr.bf16.mxu0 0
  %842 = vmatpush2.bf16.msra.mxu0 0
  %843 = vmatprep.subr.bf16.mxu0 0
  %844 = vmatpush2.bf16.msra.mxu0 0
  %845 = vmatprep.subr.bf16.mxu0 0
  %846 = vmatpush2.bf16.msra.mxu0 0
  %847 = vmatprep.subr.bf16.mxu0 0
  %848 = vmatpush2.bf16.msra.mxu0 0
  %849 = vmatprep.subr.bf16.mxu0 0
  %850 = vmatpush2.bf16.msra.mxu0 0
  %851 = vmatprep.subr.bf16.mxu0 0
  %852 = vmatpush2.bf16.msra.mxu0 0
  %853 = vmatprep.mubr.bf16.mxu0 0
  %854 = vmatmul.mubr.bf16.gmra.mxu0 %v816
  %v855 = vpop.f32.mrf.mxu0
  %v856 = vadd.f32 0.0, %v855
  %v857 = vpop.f32.mrf.mxu0
  %v858 = vpop.f32.mrf.mxu0
  %v859 = vadd.f32 0.0, %v858
  %v860 = vpop.f32.mrf.mxu0
  %861 = vmatprep.mubr.bf16.mxu0 0
  %862 = vmatmul.mubr.bf16.gmra.mxu0 %v819
  %v863 = vpop.f32.mrf.mxu0
  %v864 = vadd.f32 0.0, %v863
  %v865 = vpop.f32.mrf.mxu0
  %v866 = vpop.f32.mrf.mxu0
  %v867 = vadd.f32 0.0, %v866
  %v868 = vpop.f32.mrf.mxu0
  %869 = vdwg.mxu0
  %s870 = scalar_lea.vmem %s5, 32
  %v871 = vld [vmem:[%s870] sm:$0xf]
  %v872 = vld [vmem:[%s870 + $0x4] sm:$0xf]
  %v873 = vld [vmem:[%s870 + $0x8] sm:$0xf]
  %v874 = vld [vmem:[%s870 + $0xc] sm:$0xf]
  %v875 = vld [vmem:[%s870 + $0x10] sm:$0xf]
  %v876 = vld [vmem:[%s870 + $0x14] sm:$0xf]
  %v877 = vld [vmem:[%s870 + $0x18] sm:$0xf]
  %v878 = vld [vmem:[%s870 + $0x1c] sm:$0xf]
  %v887 = vunpack.c.l.b16 %v871
  %v888 = vunpack.c.l.b16 %v872
  %v889 = vunpack.c.l.b16 %v873
  %v890 = vunpack.c.l.b16 %v874
  %v891 = vunpack.c.l.b16 %v875
  %v892 = vunpack.c.l.b16 %v876
  %v893 = vunpack.c.l.b16 %v877
  %v894 = vunpack.c.l.b16 %v878
  %v895 = vpack.c.b16 %v888, %v887
  %v896 = vpack.c.b16 %v890, %v889
  %v897 = vpack.c.b16 %v892, %v891
  %v898 = vpack.c.b16 %v894, %v893
  %903 = vmatprep.subr.bf16.mxu0 0
  %904 = vmatpush1.bf16.msra.mxu0 0
  %905 = vmatprep.subr.bf16.mxu0 0
  %906 = vmatpush1.bf16.msra.mxu0 0
  %907 = vmatprep.subr.bf16.mxu0 0
  %908 = vmatpush1.bf16.msra.mxu0 0
  %909 = vmatprep.subr.bf16.mxu0 0
  %910 = vmatpush1.bf16.msra.mxu0 0
  %911 = vmatprep.subr.bf16.mxu0 0
  %912 = vmatpush1.bf16.msra.mxu0 %v898
  %913 = vmatprep.subr.bf16.mxu0 0
  %914 = vmatpush1.bf16.msra.mxu0 %v897
  %915 = vmatprep.subr.bf16.mxu0 0
  %916 = vmatpush1.bf16.msra.mxu0 %v896
  %917 = vmatprep.subr.bf16.mxu0 0
  %918 = vmatpush1.bf16.msra.mxu0 %v895
  %919 = vmatprep.subr.bf16.mxu0 0
  %920 = vmatpush2.bf16.msra.mxu0 0
  %921 = vmatprep.subr.bf16.mxu0 0
  %922 = vmatpush2.bf16.msra.mxu0 0
  %923 = vmatprep.subr.bf16.mxu0 0
  %924 = vmatpush2.bf16.msra.mxu0 0
  %925 = vmatprep.subr.bf16.mxu0 0
  %926 = vmatpush2.bf16.msra.mxu0 0
  %927 = vmatprep.subr.bf16.mxu0 0
  %928 = vmatpush2.bf16.msra.mxu0 0
  %929 = vmatprep.subr.bf16.mxu0 0
  %930 = vmatpush2.bf16.msra.mxu0 0
  %931 = vmatprep.subr.bf16.mxu0 0
  %932 = vmatpush2.bf16.msra.mxu0 0
  %933 = vmatprep.subr.bf16.mxu0 0
  %934 = vmatpush2.bf16.msra.mxu0 0
  %935 = vmatprep.mubr.bf16.mxu0 0
  %936 = vmatmul.mubr.bf16.gmra.mxu0 %v816
  %v937 = vpop.f32.mrf.mxu0
  %v938 = vadd.f32 0.0, %v937
  %v939 = vpop.f32.mrf.mxu0
  %v940 = vpop.f32.mrf.mxu0
  %v941 = vadd.f32 0.0, %v940
  %v942 = vpop.f32.mrf.mxu0
  %943 = vmatprep.mubr.bf16.mxu0 0
  %944 = vmatmul.mubr.bf16.gmra.mxu0 %v819
  %v945 = vpop.f32.mrf.mxu0
  %v946 = vadd.f32 0.0, %v945
  %v947 = vpop.f32.mrf.mxu0
  %v948 = vpop.f32.mrf.mxu0
  %v949 = vadd.f32 0.0, %v948
  %v950 = vpop.f32.mrf.mxu0
  %951 = vdwg.mxu0
  %952 = vmatprep.subr.mxu0 0.0
  %953 = vmatpush1.msra.mxu0 0.0
  %954 = vmatprep.subr.mxu0 0.0
  %955 = vmatpush1.msra.mxu0 0.0
  %956 = vmatprep.subr.mxu0 0.0
  %957 = vmatpush1.msra.mxu0 0.0
  %958 = vmatprep.subr.mxu0 0.0
  %959 = vmatpush1.msra.mxu0 0.0
  %960 = vmatprep.subr.mxu0 0.0
  %961 = vmatpush1.msra.mxu0 0.0
  %962 = vmatprep.subr.mxu0 0.0
  %963 = vmatpush1.msra.mxu0 0.0
  %964 = vmatprep.subr.mxu0 0.0
  %965 = vmatpush1.msra.mxu0 0.0
  %966 = vmatprep.subr.mxu0 0.0
  %967 = vmatpush1.msra.mxu0 0.0
  %968 = vmatprep.subr.mxu0 0.0
  %969 = vmatpush1.msra.mxu0 0.0
  %970 = vmatprep.subr.mxu0 0.0
  %971 = vmatpush1.msra.mxu0 0.0
  %972 = vmatprep.subr.mxu0 0.0
  %973 = vmatpush1.msra.mxu0 0.0
  %974 = vmatprep.subr.mxu0 0.0
  %975 = vmatpush1.msra.mxu0 0.0
  %976 = vmatprep.subr.mxu0 0.0
  %977 = vmatpush1.msra.mxu0 %v949
  %978 = vmatprep.subr.mxu0 0.0
  %979 = vmatpush1.msra.mxu0 %v946
  %980 = vmatprep.subr.mxu0 0.0
  %981 = vmatpush1.msra.mxu0 %v941
  %982 = vmatprep.subr.mxu0 0.0
  %983 = vmatpush1.msra.mxu0 %v938
  %984 = vmatprep.subr.mxu0 0.0
  %985 = vmatpush2.msra.mxu0 0.0
  %986 = vmatprep.subr.mxu0 0.0
  %987 = vmatpush2.msra.mxu0 0.0
  %988 = vmatprep.subr.mxu0 0.0
  %989 = vmatpush2.msra.mxu0 0.0
  %990 = vmatprep.subr.mxu0 0.0
  %991 = vmatpush2.msra.mxu0 0.0
  %992 = vmatprep.subr.mxu0 0.0
  %993 = vmatpush2.msra.mxu0 0.0
  %994 = vmatprep.subr.mxu0 0.0
  %995 = vmatpush2.msra.mxu0 0.0
  %996 = vmatprep.subr.mxu0 0.0
  %997 = vmatpush2.msra.mxu0 0.0
  %998 = vmatprep.subr.mxu0 0.0
  %999 = vmatpush2.msra.mxu0 0.0
  %1000 = vmatprep.subr.mxu0 0.0
  %1001 = vmatpush2.msra.mxu0 0.0
  %1002 = vmatprep.subr.mxu0 0.0
  %1003 = vmatpush2.msra.mxu0 0.0
  %1004 = vmatprep.subr.mxu0 0.0
  %1005 = vmatpush2.msra.mxu0 0.0
  %1006 = vmatprep.subr.mxu0 0.0
  %1007 = vmatpush2.msra.mxu0 0.0
  %1008 = vmatprep.subr.mxu0 0.0
  %1009 = vmatpush2.msra.mxu0 0.0
  %1010 = vmatprep.subr.mxu0 0.0
  %1011 = vmatpush2.msra.mxu0 0.0
  %1012 = vmatprep.subr.mxu0 0.0
  %1013 = vmatpush2.msra.mxu0 0.0
  %1014 = vmatprep.subr.mxu0 0.0
  %1015 = vmatpush2.msra.mxu0 0.0
  %1016 = vmatprep.mubr.f32.mxu0 0.0
  %1017 = vmatmul.mubr.f32.gmra.mxu0 %v371
  %v1018 = vpop.f32.mrf.mxu0
  %v1019 = vadd.f32 0.0, %v1018
  %v1020 = vpop.f32.mrf.mxu0
  %1021 = vmatprep.mubr.f32.mxu0 0.0
  %1022 = vmatmul.mubr.f32.gmra.mxu0 %v374
  %v1023 = vpop.f32.mrf.mxu0
  %v1024 = vadd.f32 0.0, %v1023
  %v1025 = vpop.f32.mrf.mxu0
  %1026 = vmatprep.mubr.f32.mxu0 0.0
  %1027 = vmatmul.mubr.f32.gmra.mxu0 %v377
  %v1028 = vpop.f32.mrf.mxu0
  %v1029 = vadd.f32 0.0, %v1028
  %v1030 = vpop.f32.mrf.mxu0
  %1031 = vmatprep.mubr.f32.mxu0 0.0
  %1032 = vmatmul.mubr.f32.gmra.mxu0 %v380
  %v1033 = vpop.f32.mrf.mxu0
  %v1034 = vadd.f32 0.0, %v1033
  %v1035 = vpop.f32.mrf.mxu0
  %1036 = vdwg.mxu0
  %1037 = vmatprep.subr.mxu0 0.0
  %1038 = vmatpush1.msra.mxu0 0.0
  %1039 = vmatprep.subr.mxu0 0.0
  %1040 = vmatpush1.msra.mxu0 0.0
  %1041 = vmatprep.subr.mxu0 0.0
  %1042 = vmatpush1.msra.mxu0 0.0
  %1043 = vmatprep.subr.mxu0 0.0
  %1044 = vmatpush1.msra.mxu0 0.0
  %1045 = vmatprep.subr.mxu0 0.0
  %1046 = vmatpush1.msra.mxu0 0.0
  %1047 = vmatprep.subr.mxu0 0.0
  %1048 = vmatpush1.msra.mxu0 0.0
  %1049 = vmatprep.subr.mxu0 0.0
  %1050 = vmatpush1.msra.mxu0 0.0
  %1051 = vmatprep.subr.mxu0 0.0
  %1052 = vmatpush1.msra.mxu0 0.0
  %1053 = vmatprep.subr.mxu0 0.0
  %1054 = vmatpush1.msra.mxu0 0.0
  %1055 = vmatprep.subr.mxu0 0.0
  %1056 = vmatpush1.msra.mxu0 0.0
  %1057 = vmatprep.subr.mxu0 0.0
  %1058 = vmatpush1.msra.mxu0 0.0
  %1059 = vmatprep.subr.mxu0 0.0
  %1060 = vmatpush1.msra.mxu0 0.0
  %1061 = vmatprep.subr.mxu0 0.0
  %1062 = vmatpush1.msra.mxu0 %v867
  %1063 = vmatprep.subr.mxu0 0.0
  %1064 = vmatpush1.msra.mxu0 %v864
  %1065 = vmatprep.subr.mxu0 0.0
  %1066 = vmatpush1.msra.mxu0 %v859
  %1067 = vmatprep.subr.mxu0 0.0
  %1068 = vmatpush1.msra.mxu0 %v856
  %1069 = vmatprep.subr.mxu0 0.0
  %1070 = vmatpush2.msra.mxu0 0.0
  %1071 = vmatprep.subr.mxu0 0.0
  %1072 = vmatpush2.msra.mxu0 0.0
  %1073 = vmatprep.subr.mxu0 0.0
  %1074 = vmatpush2.msra.mxu0 0.0
  %1075 = vmatprep.subr.mxu0 0.0
  %1076 = vmatpush2.msra.mxu0 0.0
  %1077 = vmatprep.subr.mxu0 0.0
  %1078 = vmatpush2.msra.mxu0 0.0
  %1079 = vmatprep.subr.mxu0 0.0
  %1080 = vmatpush2.msra.mxu0 0.0
  %1081 = vmatprep.subr.mxu0 0.0
  %1082 = vmatpush2.msra.mxu0 0.0
  %1083 = vmatprep.subr.mxu0 0.0
  %1084 = vmatpush2.msra.mxu0 0.0
  %1085 = vmatprep.subr.mxu0 0.0
  %1086 = vmatpush2.msra.mxu0 0.0
  %1087 = vmatprep.subr.mxu0 0.0
  %1088 = vmatpush2.msra.mxu0 0.0
  %1089 = vmatprep.subr.mxu0 0.0
  %1090 = vmatpush2.msra.mxu0 0.0
  %1091 = vmatprep.subr.mxu0 0.0
  %1092 = vmatpush2.msra.mxu0 0.0
  %1093 = vmatprep.subr.mxu0 0.0
  %1094 = vmatpush2.msra.mxu0 0.0
  %1095 = vmatprep.subr.mxu0 0.0
  %1096 = vmatpush2.msra.mxu0 0.0
  %1097 = vmatprep.subr.mxu0 0.0
  %1098 = vmatpush2.msra.mxu0 0.0
  %1099 = vmatprep.subr.mxu0 0.0
  %1100 = vmatpush2.msra.mxu0 0.0
  %1101 = vmatprep.mubr.f32.mxu0 0.0
  %1102 = vmatmul.mubr.f32.gmra.mxu0 %v468
  %v1103 = vpop.f32.mrf.mxu0
  %v1104 = vadd.f32 %v1019, %v1103
  %v1105 = vpop.f32.mrf.mxu0
  %1106 = vmatprep.mubr.f32.mxu0 0.0
  %1107 = vmatmul.mubr.f32.gmra.mxu0 %v471
  %v1108 = vpop.f32.mrf.mxu0
  %v1109 = vadd.f32 %v1024, %v1108
  %v1110 = vpop.f32.mrf.mxu0
  %1111 = vmatprep.mubr.f32.mxu0 0.0
  %1112 = vmatmul.mubr.f32.gmra.mxu0 %v474
  %v1113 = vpop.f32.mrf.mxu0
  %v1114 = vadd.f32 %v1029, %v1113
  %v1115 = vpop.f32.mrf.mxu0
  %1116 = vmatprep.mubr.f32.mxu0 0.0
  %1117 = vmatmul.mubr.f32.gmra.mxu0 %v477
  %v1118 = vpop.f32.mrf.mxu0
  %v1119 = vadd.f32 %v1034, %v1118
  %v1120 = vpop.f32.mrf.mxu0
  %1121 = vdwg.mxu0
  %s1122 = scalar_lea.vmem %s5, 64
  %v1123 = vld [vmem:[%s1122] sm:$0xf]
  %v1124 = vld [vmem:[%s1122 + $0x4] sm:$0xf]
  %v1125 = vld [vmem:[%s1122 + $0x8] sm:$0xf]
  %v1126 = vld [vmem:[%s1122 + $0xc] sm:$0xf]
  %v1127 = vld [vmem:[%s1122 + $0x10] sm:$0xf]
  %v1128 = vld [vmem:[%s1122 + $0x14] sm:$0xf]
  %v1129 = vld [vmem:[%s1122 + $0x18] sm:$0xf]
  %v1130 = vld [vmem:[%s1122 + $0x1c] sm:$0xf]
  %v1139 = vunpack.c.l.b16 %v1123
  %v1140 = vunpack.c.l.b16 %v1124
  %v1141 = vunpack.c.l.b16 %v1125
  %v1142 = vunpack.c.l.b16 %v1126
  %v1143 = vunpack.c.l.b16 %v1127
  %v1144 = vunpack.c.l.b16 %v1128
  %v1145 = vunpack.c.l.b16 %v1129
  %v1146 = vunpack.c.l.b16 %v1130
  %v1147 = vpack.c.b16 %v1140, %v1139
  %v1148 = vpack.c.b16 %v1142, %v1141
  %v1149 = vpack.c.b16 %v1144, %v1143
  %v1150 = vpack.c.b16 %v1146, %v1145
  %1155 = vmatprep.subr.bf16.mxu0 0
  %1156 = vmatpush1.bf16.msra.mxu0 0
  %1157 = vmatprep.subr.bf16.mxu0 0
  %1158 = vmatpush1.bf16.msra.mxu0 0
  %1159 = vmatprep.subr.bf16.mxu0 0
  %1160 = vmatpush1.bf16.msra.mxu0 0
  %1161 = vmatprep.subr.bf16.mxu0 0
  %1162 = vmatpush1.bf16.msra.mxu0 0
  %1163 = vmatprep.subr.bf16.mxu0 0
  %1164 = vmatpush1.bf16.msra.mxu0 %v1150
  %1165 = vmatprep.subr.bf16.mxu0 0
  %1166 = vmatpush1.bf16.msra.mxu0 %v1149
  %1167 = vmatprep.subr.bf16.mxu0 0
  %1168 = vmatpush1.bf16.msra.mxu0 %v1148
  %1169 = vmatprep.subr.bf16.mxu0 0
  %1170 = vmatpush1.bf16.msra.mxu0 %v1147
  %1171 = vmatprep.subr.bf16.mxu0 0
  %1172 = vmatpush2.bf16.msra.mxu0 0
  %1173 = vmatprep.subr.bf16.mxu0 0
  %1174 = vmatpush2.bf16.msra.mxu0 0
  %1175 = vmatprep.subr.bf16.mxu0 0
  %1176 = vmatpush2.bf16.msra.mxu0 0
  %1177 = vmatprep.subr.bf16.mxu0 0
  %1178 = vmatpush2.bf16.msra.mxu0 0
  %1179 = vmatprep.subr.bf16.mxu0 0
  %1180 = vmatpush2.bf16.msra.mxu0 0
  %1181 = vmatprep.subr.bf16.mxu0 0
  %1182 = vmatpush2.bf16.msra.mxu0 0
  %1183 = vmatprep.subr.bf16.mxu0 0
  %1184 = vmatpush2.bf16.msra.mxu0 0
  %1185 = vmatprep.subr.bf16.mxu0 0
  %1186 = vmatpush2.bf16.msra.mxu0 0
  %1187 = vmatprep.mubr.bf16.mxu0 0
  %1188 = vmatmul.mubr.bf16.gmra.mxu0 %v816
  %v1189 = vpop.f32.mrf.mxu0
  %v1190 = vadd.f32 0.0, %v1189
  %v1191 = vpop.f32.mrf.mxu0
  %v1192 = vpop.f32.mrf.mxu0
  %v1193 = vadd.f32 0.0, %v1192
  %v1194 = vpop.f32.mrf.mxu0
  %1195 = vmatprep.mubr.bf16.mxu0 0
  %1196 = vmatmul.mubr.bf16.gmra.mxu0 %v819
  %v1197 = vpop.f32.mrf.mxu0
  %v1198 = vadd.f32 0.0, %v1197
  %v1199 = vpop.f32.mrf.mxu0
  %v1200 = vpop.f32.mrf.mxu0
  %v1201 = vadd.f32 0.0, %v1200
  %v1202 = vpop.f32.mrf.mxu0
  %1203 = vdwg.mxu0
  %1204 = vmatprep.subr.mxu0 0.0
  %1205 = vmatpush1.msra.mxu0 0.0
  %1206 = vmatprep.subr.mxu0 0.0
  %1207 = vmatpush1.msra.mxu0 0.0
  %1208 = vmatprep.subr.mxu0 0.0
  %1209 = vmatpush1.msra.mxu0 0.0
  %1210 = vmatprep.subr.mxu0 0.0
  %1211 = vmatpush1.msra.mxu0 0.0
  %1212 = vmatprep.subr.mxu0 0.0
  %1213 = vmatpush1.msra.mxu0 0.0
  %1214 = vmatprep.subr.mxu0 0.0
  %1215 = vmatpush1.msra.mxu0 0.0
  %1216 = vmatprep.subr.mxu0 0.0
  %1217 = vmatpush1.msra.mxu0 0.0
  %1218 = vmatprep.subr.mxu0 0.0
  %1219 = vmatpush1.msra.mxu0 0.0
  %1220 = vmatprep.subr.mxu0 0.0
  %1221 = vmatpush1.msra.mxu0 0.0
  %1222 = vmatprep.subr.mxu0 0.0
  %1223 = vmatpush1.msra.mxu0 0.0
  %1224 = vmatprep.subr.mxu0 0.0
  %1225 = vmatpush1.msra.mxu0 0.0
  %1226 = vmatprep.subr.mxu0 0.0
  %1227 = vmatpush1.msra.mxu0 0.0
  %1228 = vmatprep.subr.mxu0 0.0
  %1229 = vmatpush1.msra.mxu0 %v1201
  %1230 = vmatprep.subr.mxu0 0.0
  %1231 = vmatpush1.msra.mxu0 %v1198
  %1232 = vmatprep.subr.mxu0 0.0
  %1233 = vmatpush1.msra.mxu0 %v1193
  %1234 = vmatprep.subr.mxu0 0.0
  %1235 = vmatpush1.msra.mxu0 %v1190
  %1236 = vmatprep.subr.mxu0 0.0
  %1237 = vmatpush2.msra.mxu0 0.0
  %1238 = vmatprep.subr.mxu0 0.0
  %1239 = vmatpush2.msra.mxu0 0.0
  %1240 = vmatprep.subr.mxu0 0.0
  %1241 = vmatpush2.msra.mxu0 0.0
  %1242 = vmatprep.subr.mxu0 0.0
  %1243 = vmatpush2.msra.mxu0 0.0
  %1244 = vmatprep.subr.mxu0 0.0
  %1245 = vmatpush2.msra.mxu0 0.0
  %1246 = vmatprep.subr.mxu0 0.0
  %1247 = vmatpush2.msra.mxu0 0.0
  %1248 = vmatprep.subr.mxu0 0.0
  %1249 = vmatpush2.msra.mxu0 0.0
  %1250 = vmatprep.subr.mxu0 0.0
  %1251 = vmatpush2.msra.mxu0 0.0
  %1252 = vmatprep.subr.mxu0 0.0
  %1253 = vmatpush2.msra.mxu0 0.0
  %1254 = vmatprep.subr.mxu0 0.0
  %1255 = vmatpush2.msra.mxu0 0.0
  %1256 = vmatprep.subr.mxu0 0.0
  %1257 = vmatpush2.msra.mxu0 0.0
  %1258 = vmatprep.subr.mxu0 0.0
  %1259 = vmatpush2.msra.mxu0 0.0
  %1260 = vmatprep.subr.mxu0 0.0
  %1261 = vmatpush2.msra.mxu0 0.0
  %1262 = vmatprep.subr.mxu0 0.0
  %1263 = vmatpush2.msra.mxu0 0.0
  %1264 = vmatprep.subr.mxu0 0.0
  %1265 = vmatpush2.msra.mxu0 0.0
  %1266 = vmatprep.subr.mxu0 0.0
  %1267 = vmatpush2.msra.mxu0 0.0
  %1268 = vmatprep.mubr.f32.mxu0 0.0
  %1269 = vmatmul.mubr.f32.gmra.mxu0 %v668
  %v1270 = vpop.f32.mrf.mxu0
  %v1271 = vadd.f32 0.0, %v1270
  %v1272 = vpop.f32.mrf.mxu0
  %1273 = vmatprep.mubr.f32.mxu0 0.0
  %1274 = vmatmul.mubr.f32.gmra.mxu0 %v671
  %v1275 = vpop.f32.mrf.mxu0
  %v1276 = vadd.f32 0.0, %v1275
  %v1277 = vpop.f32.mrf.mxu0
  %1278 = vmatprep.mubr.f32.mxu0 0.0
  %1279 = vmatmul.mubr.f32.gmra.mxu0 %v674
  %v1280 = vpop.f32.mrf.mxu0
  %v1281 = vadd.f32 0.0, %v1280
  %v1282 = vpop.f32.mrf.mxu0
  %1283 = vmatprep.mubr.f32.mxu0 0.0
  %1284 = vmatmul.mubr.f32.gmra.mxu0 %v677
  %v1285 = vpop.f32.mrf.mxu0
  %v1286 = vadd.f32 0.0, %v1285
  %v1287 = vpop.f32.mrf.mxu0
  %1288 = vdwg.mxu0
  %v1289 = vadd.f32 %v1104, %v1271
  %v1290 = vadd.f32 %v1109, %v1276
  %v1291 = vadd.f32 %v1114, %v1281
  %v1292 = vadd.f32 %v1119, %v1286
  %v1293 = vld [vmem:[%s6 + $0x1] sm:$0x1]
  %v1294 = vlaneseq
  %v1295 = vshrl.u32 %v1294, 7
  %v1296 = vsub.s32 0, %v1295
  %v1297 = vrot.slane %v1293, %v1296
  %v1298 = vadd.f32 %v1289, %v1297
  %v1299 = vadd.f32 %v1290, %v1297
  %v1300 = vadd.f32 %v1291, %v1297
  %v1301 = vadd.f32 %v1292, %v1297
  %v1302 = vmax.f32 %v1298, 0.0
  %v1303 = vmax.f32 %v1299, 0.0
  %v1304 = vmax.f32 %v1300, 0.0
  %v1305 = vmax.f32 %v1301, 0.0
  %1308 = vrot.lane.b32.xlu0 %v1304, 64
  %v1309 = vpop.permute.xlu0 %1308
  %1310 = vrot.lane.b32.xlu0 %v1305, 64
  %v1311 = vpop.permute.xlu0 %1310
  %v1314 = vsel %vm151, %v1302, %v1309
  %v1315 = vsel %vm151, %v1303, %v1311
  %1316 = vst [vmem:[%s7] sm:$0xff] %v1314
  %1317 = vst [vmem:[%s7 + $0x8] sm:$0xff] %v1315
  // Predicated region
  $region30: #{upblock_attention_forward.1} parent=0 // pred_check
    _
  $region31: #{upblock_attention_forward.1} parent=0 // pred_check_branch
    %1319 = sbr.rel (0) target = $region33
  $region32: #{upblock_attention_forward.1} parent=0 // pred_region
    _
  $region33: #{upblock_attention_forward.1} parent=0 // pred_fallthru
    _
  // Predicated region
  $region34: #{upblock_attention_forward.1} parent=0 // pred_check
    _
  $region35: #{upblock_attention_forward.1} parent=0 // pred_check_branch
    %1321 = sbr.rel (0) target = $region37
  $region36: #{upblock_attention_forward.1} parent=0 // pred_region
    _
  $region37: #{upblock_attention_forward.1} parent=0 // pred_fallthru
    _

</llo_original>
